<compile_context>
chip_gen: v5e
topology: v5e:2x2
jax: 0.10.0
libtpu: 0.0.40
codegen_flags: <defaults>
</compile_context>

<pallas_src>
import functools

import jax
import jax.numpy as jnp
from jax import lax
from jax.experimental import pallas as pl
from jax.experimental.pallas import tpu as pltpu


_SPATIAL_PAD = 128   # zero padding (lanes) on each side of the flattened spatial axis


# ------------------------------- fused kernel ------------------------------- #

def _bottleneck_kernel(x_ref, wr_ref, wc_ref, we_ref, ws1_ref, bs1_ref,
                       ws2_ref, bs2_ref, o_ref, *, H, W):
    """Whole bottleneck for one batch element, channels-first (C, H*W) layout."""
    HW = H * W
    x = x_ref[0]                                                 # (Cin, HW) f32

    # conv_reduce (1x1) + leaky_relu(0.2): bf16 MXU inputs, f32 accumulate.
    h = jnp.dot(wr_ref[...], x.astype(jnp.bfloat16),
                preferred_element_type=jnp.float32)              # (D, HW)
    h = jnp.where(h >= 0.0, h, 0.2 * h)
    D = h.shape[0]

    # Grouped 3x3 conv (pad=1, stride=1): zero-pad the flattened spatial axis
    # (aligned lane concat), take 9 shifted windows, mask x-boundaries, stack
    # along K and do a single MXU matmul with the block-diagonal weight.
    zpad = jnp.zeros((D, _SPATIAL_PAD), jnp.float32)
    padded = jnp.concatenate([zpad, h, zpad], axis=1)            # (D, HW + 2*PAD)
    px = lax.broadcasted_iota(jnp.int32, (1, HW), 1) % W         # x coord per lane
    taps = []
    for dy in (-1, 0, 1):
        for dx in (-1, 0, 1):
            start = _SPATIAL_PAD + dy * W + dx
            win = padded[:, start:start + HW]                    # (D, HW)
            if dx != 0:                                          # x-boundary padding
                valid = (px + dx >= 0) & (px + dx < W)
                win = jnp.where(valid, win, 0.0)
            taps.append(win)
    hcat = jnp.concatenate(taps, axis=0)                         # (9*D, HW) f32
    h2 = jnp.dot(wc_ref[...], hcat.astype(jnp.bfloat16),
                 preferred_element_type=jnp.float32)             # (D, HW)
    h2 = jnp.where(h2 >= 0.0, h2, 0.2 * h2)

    # conv_expand (1x1), no activation (SE follows).
    bn = jnp.dot(we_ref[...], h2.astype(jnp.bfloat16),
                 preferred_element_type=jnp.float32)             # (Cout, HW)

    # Selayer (squeeze-excite) on VPU/XLU in f32: global avg pool, two tiny FCs.
    pooled = jnp.mean(bn, axis=1, keepdims=True)                 # (Cout, 1)
    s1 = jnp.sum(ws1_ref[...] * pooled, axis=0, keepdims=True) + bs1_ref[...]   # (1, C16)
    s1 = jnp.maximum(s1, 0.0)
    s2 = jnp.sum(ws2_ref[...] * s1, axis=1, keepdims=True) + bs2_ref[...]       # (Cout, 1)
    s2 = jax.nn.sigmoid(s2)

    # Channel scale + identity shortcut; output stays NCHW-flat -> lane-dense store.
    o_ref[0] = (x + bn * s2).astype(o_ref.dtype)


# --------------------------- parameters (synthetic) ------------------------- #

def init_params(key, in_channels, out_channels, cardinality):
    """Deterministic synthetic weights in PyTorch layout + kernel layout."""
    D = out_channels // 2
    Cg = D // cardinality
    C16 = out_channels // 16
    ks = jax.random.split(key, 7)
    sc = 0.05
    # PyTorch-layout weights (OIHW) for the reference.
    w_reduce_t = sc * jax.random.normal(ks[0], (D, in_channels, 1, 1), jnp.float32)
    w_conv_t   = sc * jax.random.normal(ks[1], (D, Cg, 3, 3), jnp.float32)   # grouped
    w_expand_t = sc * jax.random.normal(ks[2], (out_channels, D, 1, 1), jnp.float32)
    w_se1_t    = sc * jax.random.normal(ks[3], (C16, out_channels, 1, 1), jnp.float32)
    b_se1      = sc * jax.random.normal(ks[4], (C16,), jnp.float32)
    w_se2_t    = sc * jax.random.normal(ks[5], (out_channels, C16, 1, 1), jnp.float32)
    b_se2      = sc * jax.random.normal(ks[6], (out_channels,), jnp.float32)

    # Grouped 3x3 conv -> (D, 9*D) block-diagonal per-tap weight, taps ordered
    # (ky, kx) row-major, matching the in-kernel tap loop (left-multiply form).
    w_cat = jnp.zeros((D, 9 * D), jnp.float32)
    for ky in range(3):
        for kx in range(3):
            t = ky * 3 + kx
            tap = jnp.zeros((D, D), jnp.float32)
            for g in range(cardinality):
                blk = w_conv_t[g * Cg:(g + 1) * Cg, :, ky, kx]   # (Cg_out, Cg_in)
                tap = tap.at[g * Cg:(g + 1) * Cg, g * Cg:(g + 1) * Cg].set(blk)
            w_cat = w_cat.at[:, t * D:(t + 1) * D].set(tap)

    return dict(
        # PyTorch-layout (reference)
        w_reduce_t=w_reduce_t, w_conv_t=w_conv_t, w_expand_t=w_expand_t,
        w_se1_t=w_se1_t, w_se2_t=w_se2_t, b_se1_vec=b_se1, b_se2_vec=b_se2,
        # kernel-layout (bf16 at MXU inputs, f32 elsewhere)
        w_reduce_k=w_reduce_t[:, :, 0, 0].astype(jnp.bfloat16),      # (D, Cin)
        w_conv_k=w_cat.astype(jnp.bfloat16),                          # (D, 9D)
        w_expand_k=w_expand_t[:, :, 0, 0].astype(jnp.bfloat16),      # (Cout, D)
        w_se1_k=jnp.transpose(w_se1_t[:, :, 0, 0]),                   # (Cout, C16)
        b_se1_k=b_se1[None, :],                                       # (1, C16)
        w_se2_k=w_se2_t[:, :, 0, 0],                                  # (Cout, C16)
        b_se2_k=b_se2[:, None],                                       # (Cout, 1)
    )


# ------------------------------- forward pass ------------------------------ #

def resnext_bottleneck_forward(x_nchw, p, stride=1):
    # TODO(synk): stride != 1 path (AvgPool2d(2,2) shortcut + strided grouped conv)
    # not implemented; default config uses stride=1 -> identity shortcut.
    assert stride == 1
    B, Cin, H, W = x_nchw.shape
    HW = H * W
    D = p["w_reduce_k"].shape[0]
    Cout = p["w_expand_k"].shape[0]
    C16 = p["w_se1_k"].shape[1]
    assert Cin == Cout, "identity shortcut requires in_channels == out_channels"
    assert W + 1 <= _SPATIAL_PAD

    x2 = x_nchw.reshape(B, Cin, HW).astype(jnp.float32)          # free reshape (NCHW-flat)
    kernel = functools.partial(_bottleneck_kernel, H=H, W=W)
    out = pl.pallas_call(
        kernel,
        out_shape=jax.ShapeDtypeStruct((B, Cout, HW), jnp.float32),
        grid_spec=pltpu.PrefetchScalarGridSpec(
            num_scalar_prefetch=0,
            grid=(B,),
            in_specs=[
                pl.BlockSpec((1, Cin, HW), lambda b: (b, 0, 0)),   # x (per batch)
                pl.BlockSpec((D, Cin), lambda b: (0, 0)),          # w_reduce  (bf16)
                pl.BlockSpec((D, 9 * D), lambda b: (0, 0)),        # w_conv    (bf16)
                pl.BlockSpec((Cout, D), lambda b: (0, 0)),         # w_expand  (bf16)
                pl.BlockSpec((Cout, C16), lambda b: (0, 0)),       # w_se1     (f32)
                pl.BlockSpec((1, C16), lambda b: (0, 0)),          # b_se1
                pl.BlockSpec((Cout, C16), lambda b: (0, 0)),       # w_se2
                pl.BlockSpec((Cout, 1), lambda b: (0, 0)),         # b_se2
            ],
            out_specs=pl.BlockSpec((1, Cout, HW), lambda b: (b, 0, 0)),
        ),
        compiler_params=pltpu.CompilerParams(
            dimension_semantics=("parallel",)),
    )(x2, p["w_reduce_k"], p["w_conv_k"], p["w_expand_k"],
      p["w_se1_k"], p["b_se1_k"], p["w_se2_k"], p["b_se2_k"])
    return out.reshape(B, Cout, H, W)                            # free reshape back to NCHW


# ------------------------------ pure-JAX reference -------------------------- #

def ref_forward(x, p, cardinality):
    dn = ("NCHW", "OIHW", "NCHW")
    hi = lax.Precision.HIGHEST
    h = lax.conv_general_dilated(x, p["w_reduce_t"], (1, 1), "VALID",
                                 dimension_numbers=dn, precision=hi)
    h = jnp.where(h >= 0, h, 0.2 * h)
    h = lax.conv_general_dilated(h, p["w_conv_t"], (1, 1), ((1, 1), (1, 1)),
                                 dimension_numbers=dn,
                                 feature_group_count=cardinality, precision=hi)
    h = jnp.where(h >= 0, h, 0.2 * h)
    bn = lax.conv_general_dilated(h, p["w_expand_t"], (1, 1), "VALID",
                                  dimension_numbers=dn, precision=hi)
    pooled = jnp.mean(bn, axis=(2, 3), keepdims=True)
    s = lax.conv_general_dilated(pooled, p["w_se1_t"], (1, 1), "VALID",
                                 dimension_numbers=dn, precision=hi)
    s = jnp.maximum(s + p["b_se1_vec"][None, :, None, None], 0.0)
    s = lax.conv_general_dilated(s, p["w_se2_t"], (1, 1), "VALID",
                                 dimension_numbers=dn, precision=hi)
    s = jax.nn.sigmoid(s + p["b_se2_vec"][None, :, None, None])
    return x + bn * s


# ----------------------------------- main ----------------------------------- #

if __name__ == "__main__":
    B, Cin, H, W = 2, 64, 16, 16
    Cout, cardinality = 64, 8            # D = 32, group width 4, SE squeeze = 4

    key = jax.random.PRNGKey(0)
    kx_, kp_ = jax.random.split(key)
    x = jax.random.normal(kx_, (B, Cin, H, W), jnp.float32)
    p = init_params(kp_, Cin, Cout, cardinality)

    fwd = jax.jit(lambda xx: resnext_bottleneck_forward(xx, p))
    out = jax.block_until_ready(fwd(x))
    assert out.shape == (B, Cout, H, W)

    ref = ref_forward(x, p, cardinality)
    # bf16 MXU inputs (f32 accumulation) vs f32 reference -> loosened tolerance.
    if not jnp.allclose(out, ref, atol=1e-2, rtol=1e-2):
        raise AssertionError(
            f"mismatch vs reference: max abs err {float(jnp.max(jnp.abs(out - ref)))}")

    print("KERNEL_OK")
</pallas_src>

<mosaic_0001>
module attributes {stable_mosaic.version = 11 : i64} {
  func.func @_bottleneck_kernel(%arg0: i32, %arg1: memref<1x64x256xf32, #tpu.memory_space<vmem>>, %arg2: memref<32x64xbf16, #tpu.memory_space<vmem>>, %arg3: memref<32x288xbf16, #tpu.memory_space<vmem>>, %arg4: memref<64x32xbf16, #tpu.memory_space<vmem>>, %arg5: memref<64x4xf32, #tpu.memory_space<vmem>>, %arg6: memref<1x4xf32, #tpu.memory_space<vmem>>, %arg7: memref<64x4xf32, #tpu.memory_space<vmem>>, %arg8: memref<64x1xf32, #tpu.memory_space<vmem>>, %arg9: memref<1x64x256xf32, #tpu.memory_space<vmem>>) attributes {dimension_semantics = [#tpu.dimension_semantics<parallel>], iteration_bounds = array<i64: 2>, scalar_prefetch = 0 : i64, scratch_operands = 0 : i64, tpu.core_type = #tpu.core_type<tc>, window_params = [{transform_indices = @transform_0, window_bounds = array<i64: 1, 64, 256>}, {pipeline_mode = #tpu.pipeline_mode<synchronous>, transform_indices = @transform_1, window_bounds = array<i64: 32, 64>}, {pipeline_mode = #tpu.pipeline_mode<synchronous>, transform_indices = @transform_2, window_bounds = array<i64: 32, 288>}, {pipeline_mode = #tpu.pipeline_mode<synchronous>, transform_indices = @transform_3, window_bounds = array<i64: 64, 32>}, {pipeline_mode = #tpu.pipeline_mode<synchronous>, transform_indices = @transform_4, window_bounds = array<i64: 64, 4>}, {pipeline_mode = #tpu.pipeline_mode<synchronous>, transform_indices = @transform_5, window_bounds = array<i64: 1, 4>}, {pipeline_mode = #tpu.pipeline_mode<synchronous>, transform_indices = @transform_6, window_bounds = array<i64: 64, 4>}, {pipeline_mode = #tpu.pipeline_mode<synchronous>, transform_indices = @transform_7, window_bounds = array<i64: 64, 1>}, {transform_indices = @transform_8, window_bounds = array<i64: 1, 64, 256>}]} {
    %c0 = arith.constant 0 : index
    %c0_0 = arith.constant 0 : index
    %c0_1 = arith.constant 0 : index
    %0 = vector.load %arg1[%c0, %c0_0, %c0_1] : memref<1x64x256xf32, #tpu.memory_space<vmem>>, vector<1x64x256xf32>
    %1 = vector.shape_cast %0 : vector<1x64x256xf32> to vector<64x256xf32>
    %c0_2 = arith.constant 0 : index
    %c0_3 = arith.constant 0 : index
    %2 = vector.load %arg2[%c0_2, %c0_3] : memref<32x64xbf16, #tpu.memory_space<vmem>>, vector<32x64xbf16>
    %3 = arith.truncf %1 : vector<64x256xf32> to vector<64x256xbf16>
    %cst = arith.constant dense<0.000000e+00> : vector<32x256xf32>
    %4 = tpu.matmul %2, %3, %cst {dimension_numbers = #tpu.dot_dimension_numbers<[1], [0], [0], [1], [0, 0, 1, 1], [], []>} : vector<32x64xbf16>, vector<64x256xbf16>, vector<32x256xf32> -> vector<32x256xf32>
    %cst_4 = arith.constant 0.000000e+00 : f32
    %5 = vector.broadcast %cst_4 : f32 to vector<32x256xf32>
    %6 = arith.cmpf oge, %4, %5 : vector<32x256xf32>
    %cst_5 = arith.constant 2.000000e-01 : f32
    %7 = vector.broadcast %cst_5 : f32 to vector<32x256xf32>
    %8 = arith.mulf %7, %4 : vector<32x256xf32>
    %9 = arith.select %6, %4, %8 : vector<32x256xi1>, vector<32x256xf32>
    %cst_6 = arith.constant 0.000000e+00 : f32
    %10 = vector.broadcast %cst_6 : f32 to vector<32x128xf32>
    %11 = tpu.concatenate %10, %9, %10 in 1 : vector<32x128xf32>, vector<32x256xf32>, vector<32x128xf32> -> vector<32x512xf32>
    %12 = tpu.iota {dimensions = array<i32: 1>} : vector<1x256xi32>
    %c16_i32 = arith.constant 16 : i32
    %c0_i32 = arith.constant 0 : i32
    %13 = arith.cmpi eq, %c16_i32, %c0_i32 : i32
    %c1_i32 = arith.constant 1 : i32
    %14 = arith.select %13, %c1_i32, %c16_i32 : i32
    %15 = vector.broadcast %14 : i32 to vector<1x256xi32>
    %16 = arith.remsi %12, %15 : vector<1x256xi32>
    %c0_i32_7 = arith.constant 0 : i32
    %17 = vector.broadcast %c0_i32_7 : i32 to vector<1x256xi32>
    %18 = arith.cmpi ne, %16, %17 : vector<1x256xi32>
    %c0_i32_8 = arith.constant 0 : i32
    %19 = vector.broadcast %c0_i32_8 : i32 to vector<1x256xi32>
    %20 = arith.cmpi slt, %16, %19 : vector<1x256xi32>
    %c0_i32_9 = arith.constant 0 : i32
    %21 = arith.cmpi slt, %14, %c0_i32_9 : i32
    %22 = vector.broadcast %21 : i1 to vector<1x256xi1>
    %23 = vector.broadcast %22 : vector<1x256xi1> to vector<1x256xi1>
    %24 = arith.xori %20, %23 : vector<1x256xi1>
    %25 = arith.andi %24, %18 : vector<1x256xi1>
    %26 = vector.broadcast %14 : i32 to vector<1x256xi32>
    %27 = arith.addi %16, %26 : vector<1x256xi32>
    %28 = arith.select %25, %27, %16 : vector<1x256xi1>, vector<1x256xi32>
    %29 = vector.extract_strided_slice %11 {offsets = [0, 111], sizes = [32, 256], strides = [1, 1]} : vector<32x512xf32> to vector<32x256xf32>
    %c-1_i32 = arith.constant -1 : i32
    %30 = vector.broadcast %c-1_i32 : i32 to vector<1x256xi32>
    %31 = arith.addi %28, %30 : vector<1x256xi32>
    %c0_i32_10 = arith.constant 0 : i32
    %32 = vector.broadcast %c0_i32_10 : i32 to vector<1x256xi32>
    %33 = arith.cmpi sge, %31, %32 : vector<1x256xi32>
    %c-1_i32_11 = arith.constant -1 : i32
    %34 = vector.broadcast %c-1_i32_11 : i32 to vector<1x256xi32>
    %35 = arith.addi %28, %34 : vector<1x256xi32>
    %c16_i32_12 = arith.constant 16 : i32
    %36 = vector.broadcast %c16_i32_12 : i32 to vector<1x256xi32>
    %37 = arith.cmpi slt, %35, %36 : vector<1x256xi32>
    %38 = arith.andi %33, %37 : vector<1x256xi1>
    %cst_13 = arith.constant 0.000000e+00 : f32
    %39 = vector.shape_cast %38 : vector<1x256xi1> to vector<1x256xi1>
    %40 = vector.broadcast %39 : vector<1x256xi1> to vector<32x256xi1>
    %41 = vector.broadcast %cst_13 : f32 to vector<32x256xf32>
    %42 = arith.select %40, %29, %41 : vector<32x256xi1>, vector<32x256xf32>
    %43 = vector.extract_strided_slice %11 {offsets = [0, 112], sizes = [32, 256], strides = [1, 1]} : vector<32x512xf32> to vector<32x256xf32>
    %44 = vector.extract_strided_slice %11 {offsets = [0, 113], sizes = [32, 256], strides = [1, 1]} : vector<32x512xf32> to vector<32x256xf32>
    %c1_i32_14 = arith.constant 1 : i32
    %45 = vector.broadcast %c1_i32_14 : i32 to vector<1x256xi32>
    %46 = arith.addi %28, %45 : vector<1x256xi32>
    %c0_i32_15 = arith.constant 0 : i32
    %47 = vector.broadcast %c0_i32_15 : i32 to vector<1x256xi32>
    %48 = arith.cmpi sge, %46, %47 : vector<1x256xi32>
    %c1_i32_16 = arith.constant 1 : i32
    %49 = vector.broadcast %c1_i32_16 : i32 to vector<1x256xi32>
    %50 = arith.addi %28, %49 : vector<1x256xi32>
    %c16_i32_17 = arith.constant 16 : i32
    %51 = vector.broadcast %c16_i32_17 : i32 to vector<1x256xi32>
    %52 = arith.cmpi slt, %50, %51 : vector<1x256xi32>
    %53 = arith.andi %48, %52 : vector<1x256xi1>
    %cst_18 = arith.constant 0.000000e+00 : f32
    %54 = vector.shape_cast %53 : vector<1x256xi1> to vector<1x256xi1>
    %55 = vector.broadcast %54 : vector<1x256xi1> to vector<32x256xi1>
    %56 = vector.broadcast %cst_18 : f32 to vector<32x256xf32>
    %57 = arith.select %55, %44, %56 : vector<32x256xi1>, vector<32x256xf32>
    %58 = vector.extract_strided_slice %11 {offsets = [0, 127], sizes = [32, 256], strides = [1, 1]} : vector<32x512xf32> to vector<32x256xf32>
    %c-1_i32_19 = arith.constant -1 : i32
    %59 = vector.broadcast %c-1_i32_19 : i32 to vector<1x256xi32>
    %60 = arith.addi %28, %59 : vector<1x256xi32>
    %c0_i32_20 = arith.constant 0 : i32
    %61 = vector.broadcast %c0_i32_20 : i32 to vector<1x256xi32>
    %62 = arith.cmpi sge, %60, %61 : vector<1x256xi32>
    %c-1_i32_21 = arith.constant -1 : i32
    %63 = vector.broadcast %c-1_i32_21 : i32 to vector<1x256xi32>
    %64 = arith.addi %28, %63 : vector<1x256xi32>
    %c16_i32_22 = arith.constant 16 : i32
    %65 = vector.broadcast %c16_i32_22 : i32 to vector<1x256xi32>
    %66 = arith.cmpi slt, %64, %65 : vector<1x256xi32>
    %67 = arith.andi %62, %66 : vector<1x256xi1>
    %cst_23 = arith.constant 0.000000e+00 : f32
    %68 = vector.shape_cast %67 : vector<1x256xi1> to vector<1x256xi1>
    %69 = vector.broadcast %68 : vector<1x256xi1> to vector<32x256xi1>
    %70 = vector.broadcast %cst_23 : f32 to vector<32x256xf32>
    %71 = arith.select %69, %58, %70 : vector<32x256xi1>, vector<32x256xf32>
    %72 = vector.extract_strided_slice %11 {offsets = [0, 128], sizes = [32, 256], strides = [1, 1]} : vector<32x512xf32> to vector<32x256xf32>
    %73 = vector.extract_strided_slice %11 {offsets = [0, 129], sizes = [32, 256], strides = [1, 1]} : vector<32x512xf32> to vector<32x256xf32>
    %c1_i32_24 = arith.constant 1 : i32
    %74 = vector.broadcast %c1_i32_24 : i32 to vector<1x256xi32>
    %75 = arith.addi %28, %74 : vector<1x256xi32>
    %c0_i32_25 = arith.constant 0 : i32
    %76 = vector.broadcast %c0_i32_25 : i32 to vector<1x256xi32>
    %77 = arith.cmpi sge, %75, %76 : vector<1x256xi32>
    %c1_i32_26 = arith.constant 1 : i32
    %78 = vector.broadcast %c1_i32_26 : i32 to vector<1x256xi32>
    %79 = arith.addi %28, %78 : vector<1x256xi32>
    %c16_i32_27 = arith.constant 16 : i32
    %80 = vector.broadcast %c16_i32_27 : i32 to vector<1x256xi32>
    %81 = arith.cmpi slt, %79, %80 : vector<1x256xi32>
    %82 = arith.andi %77, %81 : vector<1x256xi1>
    %cst_28 = arith.constant 0.000000e+00 : f32
    %83 = vector.shape_cast %82 : vector<1x256xi1> to vector<1x256xi1>
    %84 = vector.broadcast %83 : vector<1x256xi1> to vector<32x256xi1>
    %85 = vector.broadcast %cst_28 : f32 to vector<32x256xf32>
    %86 = arith.select %84, %73, %85 : vector<32x256xi1>, vector<32x256xf32>
    %87 = vector.extract_strided_slice %11 {offsets = [0, 143], sizes = [32, 256], strides = [1, 1]} : vector<32x512xf32> to vector<32x256xf32>
    %c-1_i32_29 = arith.constant -1 : i32
    %88 = vector.broadcast %c-1_i32_29 : i32 to vector<1x256xi32>
    %89 = arith.addi %28, %88 : vector<1x256xi32>
    %c0_i32_30 = arith.constant 0 : i32
    %90 = vector.broadcast %c0_i32_30 : i32 to vector<1x256xi32>
    %91 = arith.cmpi sge, %89, %90 : vector<1x256xi32>
    %c-1_i32_31 = arith.constant -1 : i32
    %92 = vector.broadcast %c-1_i32_31 : i32 to vector<1x256xi32>
    %93 = arith.addi %28, %92 : vector<1x256xi32>
    %c16_i32_32 = arith.constant 16 : i32
    %94 = vector.broadcast %c16_i32_32 : i32 to vector<1x256xi32>
    %95 = arith.cmpi slt, %93, %94 : vector<1x256xi32>
    %96 = arith.andi %91, %95 : vector<1x256xi1>
    %cst_33 = arith.constant 0.000000e+00 : f32
    %97 = vector.shape_cast %96 : vector<1x256xi1> to vector<1x256xi1>
    %98 = vector.broadcast %97 : vector<1x256xi1> to vector<32x256xi1>
    %99 = vector.broadcast %cst_33 : f32 to vector<32x256xf32>
    %100 = arith.select %98, %87, %99 : vector<32x256xi1>, vector<32x256xf32>
    %101 = vector.extract_strided_slice %11 {offsets = [0, 144], sizes = [32, 256], strides = [1, 1]} : vector<32x512xf32> to vector<32x256xf32>
    %102 = vector.extract_strided_slice %11 {offsets = [0, 145], sizes = [32, 256], strides = [1, 1]} : vector<32x512xf32> to vector<32x256xf32>
    %c1_i32_34 = arith.constant 1 : i32
    %103 = vector.broadcast %c1_i32_34 : i32 to vector<1x256xi32>
    %104 = arith.addi %28, %103 : vector<1x256xi32>
    %c0_i32_35 = arith.constant 0 : i32
    %105 = vector.broadcast %c0_i32_35 : i32 to vector<1x256xi32>
    %106 = arith.cmpi sge, %104, %105 : vector<1x256xi32>
    %c1_i32_36 = arith.constant 1 : i32
    %107 = vector.broadcast %c1_i32_36 : i32 to vector<1x256xi32>
    %108 = arith.addi %28, %107 : vector<1x256xi32>
    %c16_i32_37 = arith.constant 16 : i32
    %109 = vector.broadcast %c16_i32_37 : i32 to vector<1x256xi32>
    %110 = arith.cmpi slt, %108, %109 : vector<1x256xi32>
    %111 = arith.andi %106, %110 : vector<1x256xi1>
    %cst_38 = arith.constant 0.000000e+00 : f32
    %112 = vector.shape_cast %111 : vector<1x256xi1> to vector<1x256xi1>
    %113 = vector.broadcast %112 : vector<1x256xi1> to vector<32x256xi1>
    %114 = vector.broadcast %cst_38 : f32 to vector<32x256xf32>
    %115 = arith.select %113, %102, %114 : vector<32x256xi1>, vector<32x256xf32>
    %116 = tpu.concatenate %42, %43, %57, %71, %72, %86, %100, %101, %115 in 0 : vector<32x256xf32>, vector<32x256xf32>, vector<32x256xf32>, vector<32x256xf32>, vector<32x256xf32>, vector<32x256xf32>, vector<32x256xf32>, vector<32x256xf32>, vector<32x256xf32> -> vector<288x256xf32>
    %c0_39 = arith.constant 0 : index
    %c0_40 = arith.constant 0 : index
    %117 = vector.load %arg3[%c0_39, %c0_40] : memref<32x288xbf16, #tpu.memory_space<vmem>>, vector<32x288xbf16>
    %118 = arith.truncf %116 : vector<288x256xf32> to vector<288x256xbf16>
    %cst_41 = arith.constant dense<0.000000e+00> : vector<32x256xf32>
    %119 = tpu.matmul %117, %118, %cst_41 {dimension_numbers = #tpu.dot_dimension_numbers<[1], [0], [0], [1], [0, 0, 1, 1], [], []>} : vector<32x288xbf16>, vector<288x256xbf16>, vector<32x256xf32> -> vector<32x256xf32>
    %cst_42 = arith.constant 0.000000e+00 : f32
    %120 = vector.broadcast %cst_42 : f32 to vector<32x256xf32>
    %121 = arith.cmpf oge, %119, %120 : vector<32x256xf32>
    %cst_43 = arith.constant 2.000000e-01 : f32
    %122 = vector.broadcast %cst_43 : f32 to vector<32x256xf32>
    %123 = arith.mulf %122, %119 : vector<32x256xf32>
    %124 = arith.select %121, %119, %123 : vector<32x256xi1>, vector<32x256xf32>
    %c0_44 = arith.constant 0 : index
    %c0_45 = arith.constant 0 : index
    %125 = vector.load %arg4[%c0_44, %c0_45] : memref<64x32xbf16, #tpu.memory_space<vmem>>, vector<64x32xbf16>
    %126 = arith.truncf %124 : vector<32x256xf32> to vector<32x256xbf16>
    %cst_46 = arith.constant dense<0.000000e+00> : vector<64x256xf32>
    %127 = tpu.matmul %125, %126, %cst_46 {dimension_numbers = #tpu.dot_dimension_numbers<[1], [0], [0], [1], [0, 0, 1, 1], [], []>} : vector<64x32xbf16>, vector<32x256xbf16>, vector<64x256xf32> -> vector<64x256xf32>
    %cst_47 = arith.constant dense<0.000000e+00> : vector<64xf32>
    %128 = vector.multi_reduction <add>, %127, %cst_47 [1] : vector<64x256xf32> to vector<64xf32>
    %129 = vector.shape_cast %128 : vector<64xf32> to vector<64x1xf32>
    %cst_48 = arith.constant 2.560000e+02 : f32
    %130 = vector.broadcast %cst_48 : f32 to vector<64x1xf32>
    %131 = arith.divf %129, %130 : vector<64x1xf32>
    %c0_49 = arith.constant 0 : index
    %c0_50 = arith.constant 0 : index
    %132 = vector.load %arg5[%c0_49, %c0_50] : memref<64x4xf32, #tpu.memory_space<vmem>>, vector<64x4xf32>
    %133 = vector.broadcast %131 : vector<64x1xf32> to vector<64x4xf32>
    %134 = arith.mulf %132, %133 : vector<64x4xf32>
    %cst_51 = arith.constant dense<0.000000e+00> : vector<4xf32>
    %135 = vector.multi_reduction <add>, %134, %cst_51 [0] : vector<64x4xf32> to vector<4xf32>
    %136 = vector.shape_cast %135 : vector<4xf32> to vector<1x4xf32>
    %c0_52 = arith.constant 0 : index
    %c0_53 = arith.constant 0 : index
    %137 = vector.load %arg6[%c0_52, %c0_53] : memref<1x4xf32, #tpu.memory_space<vmem>>, vector<1x4xf32>
    %138 = arith.addf %136, %137 : vector<1x4xf32>
    %cst_54 = arith.constant 0.000000e+00 : f32
    %139 = vector.broadcast %cst_54 : f32 to vector<1x4xf32>
    %140 = arith.maximumf %138, %139 : vector<1x4xf32>
    %c0_55 = arith.constant 0 : index
    %c0_56 = arith.constant 0 : index
    %141 = vector.load %arg7[%c0_55, %c0_56] : memref<64x4xf32, #tpu.memory_space<vmem>>, vector<64x4xf32>
    %142 = vector.broadcast %140 : vector<1x4xf32> to vector<64x4xf32>
    %143 = arith.mulf %141, %142 : vector<64x4xf32>
    %cst_57 = arith.constant dense<0.000000e+00> : vector<64xf32>
    %144 = vector.multi_reduction <add>, %143, %cst_57 [1] : vector<64x4xf32> to vector<64xf32>
    %145 = vector.shape_cast %144 : vector<64xf32> to vector<64x1xf32>
    %c0_58 = arith.constant 0 : index
    %c0_59 = arith.constant 0 : index
    %146 = vector.load %arg8[%c0_58, %c0_59] : memref<64x1xf32, #tpu.memory_space<vmem>>, vector<64x1xf32>
    %147 = arith.addf %145, %146 : vector<64x1xf32>
    %148 = arith.negf %147 : vector<64x1xf32>
    %149 = math.exp %148 : vector<64x1xf32>
    %cst_60 = arith.constant 1.000000e+00 : f32
    %150 = vector.broadcast %cst_60 : f32 to vector<64x1xf32>
    %151 = arith.addf %150, %149 : vector<64x1xf32>
    %152 = arith.divf %150, %151 : vector<64x1xf32>
    %153 = vector.broadcast %152 : vector<64x1xf32> to vector<64x256xf32>
    %154 = arith.mulf %127, %153 : vector<64x256xf32>
    %155 = arith.addf %1, %154 : vector<64x256xf32>
    %c0_61 = arith.constant 0 : index
    %c0_62 = arith.constant 0 : index
    %c0_63 = arith.constant 0 : index
    %156 = vector.load %arg9[%c0_61, %c0_62, %c0_63] : memref<1x64x256xf32, #tpu.memory_space<vmem>>, vector<1x64x256xf32>
    %157 = vector.shape_cast %156 : vector<1x64x256xf32> to vector<64x256xf32>
    %158 = vector.shape_cast %155 : vector<64x256xf32> to vector<1x64x256xf32>
    tpu.vector_store %arg9[%c0_61, %c0_62, %c0_63], %158 {strides = array<i32>} : memref<1x64x256xf32, #tpu.memory_space<vmem>>, vector<1x64x256xf32>,
    return
  }
  func.func @transform_0(%arg0: i32) -> (i32, i32, i32) {
    %c0_i32 = arith.constant 0 : i32
    %c0_i32_0 = arith.constant 0 : i32
    %c0_i32_1 = arith.constant 0 : i32
    return %arg0, %c0_i32, %c0_i32_0 : i32, i32, i32
  }
  func.func @transform_1(%arg0: i32) -> (i32, i32) {
    %c0_i32 = arith.constant 0 : i32
    %c0_i32_0 = arith.constant 0 : i32
    %c0_i32_1 = arith.constant 0 : i32
    return %c0_i32, %c0_i32_0 : i32, i32
  }
  func.func @transform_2(%arg0: i32) -> (i32, i32) {
    %c0_i32 = arith.constant 0 : i32
    %c0_i32_0 = arith.constant 0 : i32
    %c0_i32_1 = arith.constant 0 : i32
    return %c0_i32, %c0_i32_0 : i32, i32
  }
  func.func @transform_3(%arg0: i32) -> (i32, i32) {
    %c0_i32 = arith.constant 0 : i32
    %c0_i32_0 = arith.constant 0 : i32
    %c0_i32_1 = arith.constant 0 : i32
    return %c0_i32, %c0_i32_0 : i32, i32
  }
  func.func @transform_4(%arg0: i32) -> (i32, i32) {
    %c0_i32 = arith.constant 0 : i32
    %c0_i32_0 = arith.constant 0 : i32
    %c0_i32_1 = arith.constant 0 : i32
    return %c0_i32, %c0_i32_0 : i32, i32
  }
  func.func @transform_5(%arg0: i32) -> (i32, i32) {
    %c0_i32 = arith.constant 0 : i32
    %c0_i32_0 = arith.constant 0 : i32
    %c0_i32_1 = arith.constant 0 : i32
    return %c0_i32, %c0_i32_0 : i32, i32
  }
  func.func @transform_6(%arg0: i32) -> (i32, i32) {
    %c0_i32 = arith.constant 0 : i32
    %c0_i32_0 = arith.constant 0 : i32
    %c0_i32_1 = arith.constant 0 : i32
    return %c0_i32, %c0_i32_0 : i32, i32
  }
  func.func @transform_7(%arg0: i32) -> (i32, i32) {
    %c0_i32 = arith.constant 0 : i32
    %c0_i32_0 = arith.constant 0 : i32
    %c0_i32_1 = arith.constant 0 : i32
    return %c0_i32, %c0_i32_0 : i32, i32
  }
  func.func @transform_8(%arg0: i32) -> (i32, i32, i32) {
    %c0_i32 = arith.constant 0 : i32
    %c0_i32_0 = arith.constant 0 : i32
    %c0_i32_1 = arith.constant 0 : i32
    return %arg0, %c0_i32, %c0_i32_0 : i32, i32, i32
  }
}

</mosaic_0001>

<llo_original>
// kernel: _lambda_.1
$region0: #{_lambda_.1}
  #allocation0 [shape = 'u32[]', space=smem, size = 0x4, offset = 0x4, fixed_abs, tag = 'smem constant byte address 0x4 - core index']
  #allocation1 [shape = 'u32[72,128]{1,0:T(1,128)}', space=vmem, size = 0x9000, scoped, tag = 'internal scratch']
  %s0 = inlined_call_operand.vmem [shape: f32[2,64,256], index: 0, kind: input, shape index: {}]
  %s1 = inlined_call_operand.vmem [shape: bf16[32,64], index: 1, kind: input, shape index: {}]
  %s2 = inlined_call_operand.vmem [shape: bf16[32,288], index: 2, kind: input, shape index: {}]
  %s3 = inlined_call_operand.vmem [shape: bf16[64,32], index: 3, kind: input, shape index: {}]
  %s4 = inlined_call_operand.vmem [shape: f32[64,4], index: 4, kind: input, shape index: {}]
  %s5 = inlined_call_operand.vmem [shape: f32[1,4], index: 5, kind: input, shape index: {}]
  %s6 = inlined_call_operand.vmem [shape: f32[64,4], index: 6, kind: input, shape index: {}]
  %s7 = inlined_call_operand.vmem [shape: f32[64,1], index: 7, kind: input, shape index: {}]
  %s8 = inlined_call_operand.vmem [shape: f32[2,64,256], index: 8, kind: output, shape index: {}]
  %s9 = sld [smem:[#allocation0]]
  $region65: #{_lambda_.1} parent=0
    _
  %s11 = ssub.s32 1, %s9
  %s12 = scalar_select 0, %s11, %s9
  loop: start=0, step=1, limit=4
  $region2: #{_lambda_.1} parent=0 // loop_pre_header
    _
  $region3: #{_lambda_.1} parent=0 // loop_header
    %s14 = sphi 0, %s18
    %p15 = scmp.ge.s32.totalorder %s14, 4
    %s24 = sphi 0, %s26
    %s27 = sphi 0, %s24
    %s28 = sphi 0, %s27
    %s44 = sphi 0, %s28
    %s48 = sphi 0, %s48
    %s50 = sphi 0, %s48
    %s51 = sphi 0, %s50
    %s65 = sphi 0, %s51
    %s69 = sphi 0, %s69
    %s71 = sphi 0, %s69
    %s72 = sphi 0, %s71
    %s86 = sphi 0, %s72
    %s90 = sphi 0, %s90
    %s92 = sphi 0, %s90
    %s93 = sphi 0, %s92
    %s107 = sphi 0, %s93
    %s111 = sphi 0, %s111
    %s113 = sphi 0, %s111
    %s114 = sphi 0, %s113
    %s128 = sphi 0, %s114
    %s132 = sphi 0, %s132
    %s134 = sphi 0, %s132
    %s135 = sphi 0, %s134
    %s149 = sphi 0, %s135
    %s153 = sphi 0, %s153
    %s155 = sphi 0, %s153
    %s156 = sphi 0, %s155
    %s170 = sphi 0, %s156
    %s174 = sphi 0, %s174
    %s176 = sphi 0, %s174
    %s177 = sphi 0, %s176
    %s191 = sphi 0, %s177
    %s197 = sphi 0, %s199
    %s200 = sphi 0, %s197
    %s201 = sphi 0, %s200
    %s217 = sphi 0, %s201
  $region4: #{_lambda_.1} parent=0 // loop_header_branch
    %17 = sbr.rel (%p15) target = $region8
  $region5: #{_lambda_.1} parent=0 // loop_body
    %s19 = ssub.s32 %s14, 1
    %s20 = ssub.s32 %s14, 2
    %s21 = sadd.s32 %s14, 1
    %s22 = ssub.s32 %s14, %s21
    %p23 = scmp.eq.s32.totalorder %s22, 0
    %s25 = sadd.s32 %s24, 1
    %s26 = scalar_select %p23, %s24, %s25
    %p29 = pneg %p23
    %p30 = scmp.eq.s32.totalorder %s14, 1
    %p31 = por %p29, %p30
    %p32 = scmp.ne.s32.totalorder %s24, %s27
    %p33 = scmp.eq.s32.totalorder %s14, 0
    %p34 = por %p32, %p33
    %p35 = scmp.ne.s32.totalorder %s24, %s27
    %p36 = scmp.eq.s32.totalorder %s19, 1
    %p37 = por %p35, %p36
    %p38 = scmp.ne.s32.totalorder %s27, %s28
    %p39 = scmp.eq.s32.totalorder %s19, 0
    %p40 = por %p38, %p39
    %p41 = scmp.ne.s32.totalorder %s27, %s28
    %p42 = scmp.eq.s32.totalorder %s20, 1
    %p43 = por %p41, %p42
    %p45 = scmp.ne.s32.totalorder %s28, %s44
    %p46 = scmp.eq.s32.totalorder %s20, 0
    %p47 = por %p45, %p46
    %s49 = sadd.s32 %s48, 1
    %p52 = scmp.eq.s32.totalorder %s14, 1
    %p53 = scmp.ne.s32.totalorder %s48, %s50
    %p54 = scmp.eq.s32.totalorder %s14, 0
    %p55 = por %p53, %p54
    %p56 = scmp.ne.s32.totalorder %s48, %s50
    %p57 = scmp.eq.s32.totalorder %s19, 1
    %p58 = por %p56, %p57
    %p59 = scmp.ne.s32.totalorder %s50, %s51
    %p60 = scmp.eq.s32.totalorder %s19, 0
    %p61 = por %p59, %p60
    %p62 = scmp.ne.s32.totalorder %s50, %s51
    %p63 = scmp.eq.s32.totalorder %s20, 1
    %p64 = por %p62, %p63
    %p66 = scmp.ne.s32.totalorder %s51, %s65
    %p67 = scmp.eq.s32.totalorder %s20, 0
    %p68 = por %p66, %p67
    %s70 = sadd.s32 %s69, 1
    %p73 = scmp.eq.s32.totalorder %s14, 1
    %p74 = scmp.ne.s32.totalorder %s69, %s71
    %p75 = scmp.eq.s32.totalorder %s14, 0
    %p76 = por %p74, %p75
    %p77 = scmp.ne.s32.totalorder %s69, %s71
    %p78 = scmp.eq.s32.totalorder %s19, 1
    %p79 = por %p77, %p78
    %p80 = scmp.ne.s32.totalorder %s71, %s72
    %p81 = scmp.eq.s32.totalorder %s19, 0
    %p82 = por %p80, %p81
    %p83 = scmp.ne.s32.totalorder %s71, %s72
    %p84 = scmp.eq.s32.totalorder %s20, 1
    %p85 = por %p83, %p84
    %p87 = scmp.ne.s32.totalorder %s72, %s86
    %p88 = scmp.eq.s32.totalorder %s20, 0
    %p89 = por %p87, %p88
    %s91 = sadd.s32 %s90, 1
    %p94 = scmp.eq.s32.totalorder %s14, 1
    %p95 = scmp.ne.s32.totalorder %s90, %s92
    %p96 = scmp.eq.s32.totalorder %s14, 0
    %p97 = por %p95, %p96
    %p98 = scmp.ne.s32.totalorder %s90, %s92
    %p99 = scmp.eq.s32.totalorder %s19, 1
    %p100 = por %p98, %p99
    %p101 = scmp.ne.s32.totalorder %s92, %s93
    %p102 = scmp.eq.s32.totalorder %s19, 0
    %p103 = por %p101, %p102
    %p104 = scmp.ne.s32.totalorder %s92, %s93
    %p105 = scmp.eq.s32.totalorder %s20, 1
    %p106 = por %p104, %p105
    %p108 = scmp.ne.s32.totalorder %s93, %s107
    %p109 = scmp.eq.s32.totalorder %s20, 0
    %p110 = por %p108, %p109
    %s112 = sadd.s32 %s111, 1
    %p115 = scmp.eq.s32.totalorder %s14, 1
    %p116 = scmp.ne.s32.totalorder %s111, %s113
    %p117 = scmp.eq.s32.totalorder %s14, 0
    %p118 = por %p116, %p117
    %p119 = scmp.ne.s32.totalorder %s111, %s113
    %p120 = scmp.eq.s32.totalorder %s19, 1
    %p121 = por %p119, %p120
    %p122 = scmp.ne.s32.totalorder %s113, %s114
    %p123 = scmp.eq.s32.totalorder %s19, 0
    %p124 = por %p122, %p123
    %p125 = scmp.ne.s32.totalorder %s113, %s114
    %p126 = scmp.eq.s32.totalorder %s20, 1
    %p127 = por %p125, %p126
    %p129 = scmp.ne.s32.totalorder %s114, %s128
    %p130 = scmp.eq.s32.totalorder %s20, 0
    %p131 = por %p129, %p130
    %s133 = sadd.s32 %s132, 1
    %p136 = scmp.eq.s32.totalorder %s14, 1
    %p137 = scmp.ne.s32.totalorder %s132, %s134
    %p138 = scmp.eq.s32.totalorder %s14, 0
    %p139 = por %p137, %p138
    %p140 = scmp.ne.s32.totalorder %s132, %s134
    %p141 = scmp.eq.s32.totalorder %s19, 1
    %p142 = por %p140, %p141
    %p143 = scmp.ne.s32.totalorder %s134, %s135
    %p144 = scmp.eq.s32.totalorder %s19, 0
    %p145 = por %p143, %p144
    %p146 = scmp.ne.s32.totalorder %s134, %s135
    %p147 = scmp.eq.s32.totalorder %s20, 1
    %p148 = por %p146, %p147
    %p150 = scmp.ne.s32.totalorder %s135, %s149
    %p151 = scmp.eq.s32.totalorder %s20, 0
    %p152 = por %p150, %p151
    %s154 = sadd.s32 %s153, 1
    %p157 = scmp.eq.s32.totalorder %s14, 1
    %p158 = scmp.ne.s32.totalorder %s153, %s155
    %p159 = scmp.eq.s32.totalorder %s14, 0
    %p160 = por %p158, %p159
    %p161 = scmp.ne.s32.totalorder %s153, %s155
    %p162 = scmp.eq.s32.totalorder %s19, 1
    %p163 = por %p161, %p162
    %p164 = scmp.ne.s32.totalorder %s155, %s156
    %p165 = scmp.eq.s32.totalorder %s19, 0
    %p166 = por %p164, %p165
    %p167 = scmp.ne.s32.totalorder %s155, %s156
    %p168 = scmp.eq.s32.totalorder %s20, 1
    %p169 = por %p167, %p168
    %p171 = scmp.ne.s32.totalorder %s156, %s170
    %p172 = scmp.eq.s32.totalorder %s20, 0
    %p173 = por %p171, %p172
    %s175 = sadd.s32 %s174, 1
    %p178 = scmp.eq.s32.totalorder %s14, 1
    %p179 = scmp.ne.s32.totalorder %s174, %s176
    %p180 = scmp.eq.s32.totalorder %s14, 0
    %p181 = por %p179, %p180
    %p182 = scmp.ne.s32.totalorder %s174, %s176
    %p183 = scmp.eq.s32.totalorder %s19, 1
    %p184 = por %p182, %p183
    %p185 = scmp.ne.s32.totalorder %s176, %s177
    %p186 = scmp.eq.s32.totalorder %s19, 0
    %p187 = por %p185, %p186
    %p188 = scmp.ne.s32.totalorder %s176, %s177
    %p189 = scmp.eq.s32.totalorder %s20, 1
    %p190 = por %p188, %p189
    %p192 = scmp.ne.s32.totalorder %s177, %s191
    %p193 = scmp.eq.s32.totalorder %s20, 0
    %p194 = por %p192, %p193
    %s195 = ssub.s32 %s14, %s21
    %p196 = scmp.eq.s32.totalorder %s195, 0
    %s198 = sadd.s32 %s197, 1
    %s199 = scalar_select %p196, %s197, %s198
    %p202 = pneg %p196
    %p203 = scmp.eq.s32.totalorder %s14, 1
    %p204 = por %p202, %p203
    %p205 = scmp.ne.s32.totalorder %s197, %s200
    %p206 = scmp.eq.s32.totalorder %s14, 0
    %p207 = por %p205, %p206
    %p208 = scmp.ne.s32.totalorder %s197, %s200
    %p209 = scmp.eq.s32.totalorder %s19, 1
    %p210 = por %p208, %p209
    %p211 = scmp.ne.s32.totalorder %s200, %s201
    %p212 = scmp.eq.s32.totalorder %s19, 0
    %p213 = por %p211, %p212
    %p214 = scmp.ne.s32.totalorder %s200, %s201
    %p215 = scmp.eq.s32.totalorder %s20, 1
    %p216 = por %p214, %p215
    %p218 = scmp.ne.s32.totalorder %s201, %s217
    %p219 = scmp.eq.s32.totalorder %s20, 0
    %p220 = por %p218, %p219
    %p221 = scmp.le.s32.totalorder 1, %s14
    %p222 = scmp.lt.s32.totalorder %s14, 3
    %p223 = pnand %p221, %p222
    %p224 = pneg %p223
    // Predicated region
    $region9: #{_lambda_.1} parent=5 // pred_check
      _
    $region10: #{_lambda_.1} parent=5 // pred_check_branch
      %226 = sbr.rel (%p223) target = $region12
    $region11: #{_lambda_.1} parent=5 // pred_region
      %s227 = ssub.s32 %s14, 1
      // Predicated region
      $region13: #{_lambda_.1} parent=11 // pred_check
        %p228 = pneg %p61
      $region14: #{_lambda_.1} parent=11 // pred_check_branch
        %230 = sbr.rel (%p228) target = $region16
      $region15: #{_lambda_.1} parent=11 // pred_region
        _
      $region16: #{_lambda_.1} parent=11 // pred_fallthru
        _
      // Predicated region
      $region17: #{_lambda_.1} parent=11 // pred_check
        %p231 = pneg %p82
      $region18: #{_lambda_.1} parent=11 // pred_check_branch
        %233 = sbr.rel (%p231) target = $region20
      $region19: #{_lambda_.1} parent=11 // pred_region
        _
      $region20: #{_lambda_.1} parent=11 // pred_fallthru
        _
      // Predicated region
      $region21: #{_lambda_.1} parent=11 // pred_check
        %p234 = pneg %p103
      $region22: #{_lambda_.1} parent=11 // pred_check_branch
        %236 = sbr.rel (%p234) target = $region24
      $region23: #{_lambda_.1} parent=11 // pred_region
        _
      $region24: #{_lambda_.1} parent=11 // pred_fallthru
        _
      // Predicated region
      $region25: #{_lambda_.1} parent=11 // pred_check
        %p237 = pneg %p124
      $region26: #{_lambda_.1} parent=11 // pred_check_branch
        %239 = sbr.rel (%p237) target = $region28
      $region27: #{_lambda_.1} parent=11 // pred_region
        _
      $region28: #{_lambda_.1} parent=11 // pred_fallthru
        _
      // Predicated region
      $region29: #{_lambda_.1} parent=11 // pred_check
        %p240 = pneg %p145
      $region30: #{_lambda_.1} parent=11 // pred_check_branch
        %242 = sbr.rel (%p240) target = $region32
      $region31: #{_lambda_.1} parent=11 // pred_region
        _
      $region32: #{_lambda_.1} parent=11 // pred_fallthru
        _
      // Predicated region
      $region33: #{_lambda_.1} parent=11 // pred_check
        %p243 = pneg %p166
      $region34: #{_lambda_.1} parent=11 // pred_check_branch
        %245 = sbr.rel (%p243) target = $region36
      $region35: #{_lambda_.1} parent=11 // pred_region
        _
      $region36: #{_lambda_.1} parent=11 // pred_fallthru
        _
      // Predicated region
      $region37: #{_lambda_.1} parent=11 // pred_check
        %p246 = pneg %p187
      $region38: #{_lambda_.1} parent=11 // pred_check_branch
        %248 = sbr.rel (%p246) target = $region40
      $region39: #{_lambda_.1} parent=11 // pred_region
        _
      $region40: #{_lambda_.1} parent=11 // pred_fallthru
        _
    $region12: #{_lambda_.1} parent=5 // pred_fallthru
      _
    %p249 = scmp.lt.s32.totalorder %s14, 2
    // Predicated region
    $region41: #{_lambda_.1} parent=5 // pred_check
      %p250 = pneg %p249
    $region42: #{_lambda_.1} parent=5 // pred_check_branch
      %252 = sbr.rel (%p250) target = $region44
    $region43: #{_lambda_.1} parent=5 // pred_region
      // Predicated region
      $region45: #{_lambda_.1} parent=43 // pred_check
        %p253 = pneg %p34
      $region46: #{_lambda_.1} parent=43 // pred_check_branch
        %255 = sbr.rel (%p253) target = $region48
      $region47: #{_lambda_.1} parent=43 // pred_region
        %p256 = scmp.lt.s32.totalorder %s14, 1
        %s257 = scalar_select %p256, %s14, 1
        %s258 = smul.addr %s257, 16
        %s259 = smul.addr %s258, 8
        %s260 = scalar_lea.vmem %s0, %s259
      $region48: #{_lambda_.1} parent=43 // pred_fallthru
        _
    $region44: #{_lambda_.1} parent=5 // pred_fallthru
      _
    %p261 = scmp.le.s32.totalorder 1, %s14
    %p262 = scmp.lt.s32.totalorder %s14, 3
    %p263 = pnand %p261, %p262
    %p264 = pneg %p263
    // Predicated region
    $region49: #{_lambda_.1} parent=5 // pred_check
      _
    $region50: #{_lambda_.1} parent=5 // pred_check_branch
      %266 = sbr.rel (%p263) target = $region52
    $region51: #{_lambda_.1} parent=5 // pred_region
      %s267 = ssub.s32 %s14, 1
      %p268 = scmp.lt.s32.totalorder %s19, 1
      %s269 = scalar_select %p268, %s19, 1
      %s270 = smul.addr %s269, 16
      %s271 = smul.addr %s270, 8
      %s272 = scalar_lea.vmem %s0, %s271
      %p273 = pneg %p40
      %p274 = pneg %p37
      %p275 = pneg %p61
      %p276 = pneg %p58
      %p277 = pneg %p82
      %p278 = pneg %p79
      %p279 = pneg %p103
      %p280 = pneg %p100
      %p281 = pneg %p124
      %p282 = pneg %p121
      %p283 = pneg %p145
      %p284 = pneg %p142
      %p285 = pneg %p166
      %p286 = pneg %p163
      %p287 = pneg %p187
      %p288 = pneg %p184
      %p289 = pneg %p213
      %p290 = pneg %p210
      %p291 = scmp.lt.s32.totalorder %s19, 1
      %s292 = scalar_select %p291, %s19, 1
      %s293 = smul.addr %s292, 16
      %s294 = smul.addr %s293, 8
      %s295 = scalar_lea.vmem %s8, %s294
      %p296 = scmp.lt.s32.totalorder %s19, 1
      %s297 = scalar_select %p296, %s19, 1
      %s298 = smul.addr %s297, 16
      %s299 = smul.addr %s298, 8
      %s300 = scalar_lea.vmem %s0, %s299
      %p301 = scmp.lt.s32.totalorder %s19, 1
      %s302 = scalar_select %p301, %s19, 1
      %s303 = smul.addr %s302, 16
      %s304 = smul.addr %s303, 8
      %s305 = scalar_lea.vmem %s8, %s304
      %v307 = vld [vmem:[%s300] sm:$0xff]
      %v308 = vld [vmem:[%s300 + $0x8] sm:$0xff]
      %v309 = vld [vmem:[%s300 + $0x10] sm:$0xff]
      %v310 = vld [vmem:[%s300 + $0x18] sm:$0xff]
      %v311 = vld [vmem:[%s300 + $0x20] sm:$0xff]
      %v312 = vld [vmem:[%s300 + $0x28] sm:$0xff]
      %v313 = vld [vmem:[%s300 + $0x30] sm:$0xff]
      %v314 = vld [vmem:[%s300 + $0x38] sm:$0xff]
      %v315 = vld [vmem:[%s300 + $0x40] sm:$0xff]
      %v316 = vld [vmem:[%s300 + $0x48] sm:$0xff]
      %v317 = vld [vmem:[%s300 + $0x50] sm:$0xff]
      %v318 = vld [vmem:[%s300 + $0x58] sm:$0xff]
      %v319 = vld [vmem:[%s300 + $0x60] sm:$0xff]
      %v320 = vld [vmem:[%s300 + $0x68] sm:$0xff]
      %v321 = vld [vmem:[%s300 + $0x70] sm:$0xff]
      %v322 = vld [vmem:[%s300 + $0x78] sm:$0xff]
      %v323 = vld [vmem:[%s1] sm:$0xf]
      %v324 = vld [vmem:[%s1 + $0x4] sm:$0xf]
      %v325 = vld [vmem:[%s1 + $0x8] sm:$0xf]
      %v326 = vld [vmem:[%s1 + $0xc] sm:$0xf]
      %v327 = vpack.c.bf16 %v309, %v307
      %v328 = vpack.c.bf16 %v310, %v308
      %v329 = vpack.c.bf16 %v313, %v311
      %v330 = vpack.c.bf16 %v314, %v312
      %v331 = vpack.c.bf16 %v317, %v315
      %v332 = vpack.c.bf16 %v318, %v316
      %v333 = vpack.c.bf16 %v321, %v319
      %v334 = vpack.c.bf16 %v322, %v320
      %v339 = vunpack.c.l.b16 %v323
      %v340 = vunpack.c.l.b16 %v324
      %v341 = vunpack.c.l.b16 %v325
      %v342 = vunpack.c.l.b16 %v326
      %v343 = vpack.c.b16 %v340, %v339
      %v344 = vpack.c.b16 %v342, %v341
      %vm345 = vcmask 523264
      %v347 = vsel %vm345, %v343, 0
      %v350 = vsel %vm345, %v344, 0
      %352 = vmatpush.bf16.msra.mxu0 0
      %353 = vmatpush.bf16.msra.mxu0 0
      %354 = vmatpush.bf16.msra.mxu0 0
      %355 = vmatpush.bf16.msra.mxu0 0
      %356 = vmatpush.bf16.msra.mxu0 %v333
      %357 = vmatpush.bf16.msra.mxu0 %v331
      %358 = vmatpush.bf16.msra.mxu0 %v329
      %359 = vmatpush.bf16.msra.mxu0 %v327
      %360 = vmatmul.bf16.gmra.mxu0 %v347
      %v361 = vpop.f32.mrf.mxu0
      %v362 = vadd.f32 0.0, %v361
      %v363 = vpop.f32.mrf.mxu0
      %v364 = vadd.f32 0.0, %v363
      %365 = vmatmul.bf16.gmra.mxu0 %v350
      %v366 = vpop.f32.mrf.mxu0
      %v367 = vadd.f32 0.0, %v366
      %v368 = vpop.f32.mrf.mxu0
      %v369 = vadd.f32 0.0, %v368
      %370 = vdwg.mxu0
      %371 = vmatpush.bf16.msra.mxu0 0
      %372 = vmatpush.bf16.msra.mxu0 0
      %373 = vmatpush.bf16.msra.mxu0 0
      %374 = vmatpush.bf16.msra.mxu0 0
      %375 = vmatpush.bf16.msra.mxu0 %v334
      %376 = vmatpush.bf16.msra.mxu0 %v332
      %377 = vmatpush.bf16.msra.mxu0 %v330
      %378 = vmatpush.bf16.msra.mxu0 %v328
      %379 = vmatmul.bf16.gmra.mxu0 %v347
      %v380 = vpop.f32.mrf.mxu0
      %v381 = vadd.f32 0.0, %v380
      %v382 = vpop.f32.mrf.mxu0
      %v383 = vadd.f32 0.0, %v382
      %384 = vmatmul.bf16.gmra.mxu0 %v350
      %v385 = vpop.f32.mrf.mxu0
      %v386 = vadd.f32 0.0, %v385
      %v387 = vpop.f32.mrf.mxu0
      %v388 = vadd.f32 0.0, %v387
      %389 = vdwg.mxu0
      %vm390 = vcmp.ge.f32.partialorder %v362, 0.0
      %vm391 = vcmp.ge.f32.partialorder %v381, 0.0
      %vm392 = vcmp.ge.f32.partialorder %v364, 0.0
      %vm393 = vcmp.ge.f32.partialorder %v383, 0.0
      %vm394 = vcmp.ge.f32.partialorder %v367, 0.0
      %vm395 = vcmp.ge.f32.partialorder %v386, 0.0
      %vm396 = vcmp.ge.f32.partialorder %v369, 0.0
      %vm397 = vcmp.ge.f32.partialorder %v388, 0.0
      %v398 = vmul.f32 %v362, 0.2
      %v399 = vmul.f32 %v381, 0.2
      %v400 = vmul.f32 %v364, 0.2
      %v401 = vmul.f32 %v383, 0.2
      %v402 = vmul.f32 %v367, 0.2
      %v403 = vmul.f32 %v386, 0.2
      %v404 = vmul.f32 %v369, 0.2
      %v405 = vmul.f32 %v388, 0.2
      %v406 = vsel %vm390, %v362, %v398
      %v407 = vsel %vm391, %v381, %v399
      %v408 = vsel %vm392, %v364, %v400
      %v409 = vsel %vm393, %v383, %v401
      %v410 = vsel %vm394, %v367, %v402
      %v411 = vsel %vm395, %v386, %v403
      %v412 = vsel %vm396, %v369, %v404
      %v413 = vsel %vm397, %v388, %v405
      %v414 = vlaneseq
      %v415 = vand.u32 %v414, 127
      %v416 = vadd.s32 %v415, 128
      %vm417 = vcmp.lt.s32.totalorder %v415, 0
      %v418 = vsub.s32 0, %v415
      %v419 = vsel %vm417, %v418, %v415
      %v420 = vshrl.u32 %v419, 4
      %v421 = vand.u32 %v419, 15
      %v422 = vsub.s32 0, %v421
      %v423 = vsel %vm417, %v422, %v421
      %vm424 = vcmp.lt.s32.totalorder %v416, 0
      %v425 = vsub.s32 0, %v416
      %v426 = vsel %vm424, %v425, %v416
      %v427 = vshrl.u32 %v426, 4
      %v428 = vand.u32 %v426, 15
      %v429 = vsub.s32 0, %v428
      %v430 = vsel %vm424, %v429, %v428
      %vm431 = vcmp.ne.s32.totalorder %v423, 0
      %vm432 = vcmp.ne.s32.totalorder %v430, 0
      %vm433 = vcmp.lt.s32.totalorder %v423, 0
      %vm434 = vcmp.lt.s32.totalorder %v430, 0
      %vm435 = vmand %vm433, %vm431
      %vm436 = vmand %vm434, %vm432
      %v437 = vadd.s32 %v423, 16
      %v438 = vadd.s32 %v430, 16
      %v439 = vsel %vm435, %v437, %v423
      %v440 = vsel %vm436, %v438, %v430
      %v441 = vadd.s32 %v439, 4294967295
      %v442 = vadd.s32 %v440, 4294967295
      %vm443 = vcmp.ge.s32.totalorder %v441, 0
      %vm444 = vcmp.ge.s32.totalorder %v442, 0
      %vm445 = vcmp.lt.s32.totalorder %v441, 16
      %vm446 = vcmp.lt.s32.totalorder %v442, 16
      %vm447 = vmand %vm443, %vm445
      %vm448 = vmand %vm444, %vm446
      %v449 = vsel %vm447, 1, 0
      %v450 = vsel %vm448, 1, 0
      %vm451 = vcmp.eq.s32.totalorder %v449, 1
      %vm452 = vcmp.eq.s32.totalorder %v450, 1
      %462 = vrot.lane.b32.xlu0 0.0, 17
      %v463 = vpop.permute.xlu0 %462
      %464 = vrot.lane.b32.xlu0 %v406, 17
      %v465 = vpop.permute.xlu0 %464
      %466 = vrot.lane.b32.xlu0 %v407, 17
      %v467 = vpop.permute.xlu0 %466
      %468 = vrot.lane.b32.xlu0 %v408, 17
      %v469 = vpop.permute.xlu0 %468
      %470 = vrot.lane.b32.xlu0 %v409, 17
      %v471 = vpop.permute.xlu0 %470
      %472 = vrot.lane.b32.xlu0 %v410, 17
      %v473 = vpop.permute.xlu0 %472
      %474 = vrot.lane.b32.xlu0 %v411, 17
      %v475 = vpop.permute.xlu0 %474
      %476 = vrot.lane.b32.xlu0 %v412, 17
      %v477 = vpop.permute.xlu0 %476
      %478 = vrot.lane.b32.xlu0 %v413, 17
      %v479 = vpop.permute.xlu0 %478
      %vm480 = vcmask 138240
      %v481 = vsel %vm480, %v463, %v465
      %v482 = vsel %vm480, %v465, %v467
      %v483 = vsel %vm480, %v463, %v469
      %v484 = vsel %vm480, %v469, %v471
      %v485 = vsel %vm480, %v463, %v473
      %v486 = vsel %vm480, %v473, %v475
      %v487 = vsel %vm480, %v463, %v477
      %v488 = vsel %vm480, %v477, %v479
      %v497 = vsel %vm451, %v481, 0.0
      %v498 = vsel %vm452, %v482, 0.0
      %v499 = vsel %vm451, %v483, 0.0
      %v500 = vsel %vm452, %v484, 0.0
      %v501 = vsel %vm451, %v485, 0.0
      %v502 = vsel %vm452, %v486, 0.0
      %v503 = vsel %vm451, %v487, 0.0
      %v504 = vsel %vm452, %v488, 0.0
      %v505 = vadd.s32 %v439, 1
      %v506 = vadd.s32 %v440, 1
      %vm507 = vcmp.ge.s32.totalorder %v505, 0
      %vm508 = vcmp.ge.s32.totalorder %v506, 0
      %vm509 = vcmp.lt.s32.totalorder %v505, 16
      %vm510 = vcmp.lt.s32.totalorder %v506, 16
      %vm511 = vmand %vm507, %vm509
      %vm512 = vmand %vm508, %vm510
      %v513 = vsel %vm511, 1, 0
      %v514 = vsel %vm512, 1, 0
      %vm515 = vcmp.eq.s32.totalorder %v513, 1
      %vm516 = vcmp.eq.s32.totalorder %v514, 1
      %517 = vrot.lane.b32.xlu0 0.0, 15
      %v518 = vpop.permute.xlu0 %517
      %519 = vrot.lane.b32.xlu0 %v406, 15
      %v520 = vpop.permute.xlu0 %519
      %521 = vrot.lane.b32.xlu0 %v407, 15
      %v522 = vpop.permute.xlu0 %521
      %523 = vrot.lane.b32.xlu0 %v408, 15
      %v524 = vpop.permute.xlu0 %523
      %525 = vrot.lane.b32.xlu0 %v409, 15
      %v526 = vpop.permute.xlu0 %525
      %527 = vrot.lane.b32.xlu0 %v410, 15
      %v528 = vpop.permute.xlu0 %527
      %529 = vrot.lane.b32.xlu0 %v411, 15
      %v530 = vpop.permute.xlu0 %529
      %531 = vrot.lane.b32.xlu0 %v412, 15
      %v532 = vpop.permute.xlu0 %531
      %533 = vrot.lane.b32.xlu0 %v413, 15
      %v534 = vpop.permute.xlu0 %533
      %vm535 = vcmask 121856
      %v536 = vsel %vm535, %v518, %v520
      %v537 = vsel %vm535, %v520, %v522
      %v538 = vsel %vm535, %v518, %v524
      %v539 = vsel %vm535, %v524, %v526
      %v540 = vsel %vm535, %v518, %v528
      %v541 = vsel %vm535, %v528, %v530
      %v542 = vsel %vm535, %v518, %v532
      %v543 = vsel %vm535, %v532, %v534
      %v552 = vsel %vm515, %v536, 0.0
      %v553 = vsel %vm516, %v537, 0.0
      %v554 = vsel %vm515, %v538, 0.0
      %v555 = vsel %vm516, %v539, 0.0
      %v556 = vsel %vm515, %v540, 0.0
      %v557 = vsel %vm516, %v541, 0.0
      %v558 = vsel %vm515, %v542, 0.0
      %v559 = vsel %vm516, %v543, 0.0
      %560 = vrot.lane.b32.xlu0 0.0, 1
      %v561 = vpop.permute.xlu0 %560
      %562 = vrot.lane.b32.xlu0 %v406, 1
      %v563 = vpop.permute.xlu0 %562
      %564 = vrot.lane.b32.xlu0 %v407, 1
      %v565 = vpop.permute.xlu0 %564
      %566 = vrot.lane.b32.xlu0 %v408, 1
      %v567 = vpop.permute.xlu0 %566
      %568 = vrot.lane.b32.xlu0 %v409, 1
      %v569 = vpop.permute.xlu0 %568
      %570 = vrot.lane.b32.xlu0 %v410, 1
      %v571 = vpop.permute.xlu0 %570
      %572 = vrot.lane.b32.xlu0 %v411, 1
      %v573 = vpop.permute.xlu0 %572
      %574 = vrot.lane.b32.xlu0 %v412, 1
      %v575 = vpop.permute.xlu0 %574
      %576 = vrot.lane.b32.xlu0 %v413, 1
      %v577 = vpop.permute.xlu0 %576
      %vm578 = vcmask 7168
      %v579 = vsel %vm578, %v561, %v563
      %v580 = vsel %vm578, %v563, %v565
      %v581 = vsel %vm578, %v561, %v567
      %v582 = vsel %vm578, %v567, %v569
      %v583 = vsel %vm578, %v561, %v571
      %v584 = vsel %vm578, %v571, %v573
      %v585 = vsel %vm578, %v561, %v575
      %v586 = vsel %vm578, %v575, %v577
      %v595 = vsel %vm451, %v579, 0.0
      %v596 = vsel %vm452, %v580, 0.0
      %v597 = vsel %vm451, %v581, 0.0
      %v598 = vsel %vm452, %v582, 0.0
      %v599 = vsel %vm451, %v583, 0.0
      %v600 = vsel %vm452, %v584, 0.0
      %v601 = vsel %vm451, %v585, 0.0
      %v602 = vsel %vm452, %v586, 0.0
      %603 = vrot.lane.b32.xlu0 %v406, 127
      %v604 = vpop.permute.xlu0 %603
      %605 = vrot.lane.b32.xlu0 %v407, 127
      %v606 = vpop.permute.xlu0 %605
      %607 = vrot.lane.b32.xlu0 0.0, 127
      %v608 = vpop.permute.xlu0 %607
      %609 = vrot.lane.b32.xlu0 %v408, 127
      %v610 = vpop.permute.xlu0 %609
      %611 = vrot.lane.b32.xlu0 %v409, 127
      %v612 = vpop.permute.xlu0 %611
      %613 = vrot.lane.b32.xlu0 %v410, 127
      %v614 = vpop.permute.xlu0 %613
      %615 = vrot.lane.b32.xlu0 %v411, 127
      %v616 = vpop.permute.xlu0 %615
      %617 = vrot.lane.b32.xlu0 %v412, 127
      %v618 = vpop.permute.xlu0 %617
      %619 = vrot.lane.b32.xlu0 %v413, 127
      %v620 = vpop.permute.xlu0 %619
      %vm621 = vcmask 1039360
      %v622 = vsel %vm621, %v604, %v606
      %v623 = vsel %vm621, %v606, %v608
      %v624 = vsel %vm621, %v610, %v612
      %v625 = vsel %vm621, %v612, %v608
      %v626 = vsel %vm621, %v614, %v616
      %v627 = vsel %vm621, %v616, %v608
      %v628 = vsel %vm621, %v618, %v620
      %v629 = vsel %vm621, %v620, %v608
      %v638 = vsel %vm515, %v622, 0.0
      %v639 = vsel %vm516, %v623, 0.0
      %v640 = vsel %vm515, %v624, 0.0
      %v641 = vsel %vm516, %v625, 0.0
      %v642 = vsel %vm515, %v626, 0.0
      %v643 = vsel %vm516, %v627, 0.0
      %v644 = vsel %vm515, %v628, 0.0
      %v645 = vsel %vm516, %v629, 0.0
      %646 = vrot.lane.b32.xlu0 %v406, 113
      %v647 = vpop.permute.xlu0 %646
      %648 = vrot.lane.b32.xlu0 %v407, 113
      %v649 = vpop.permute.xlu0 %648
      %650 = vrot.lane.b32.xlu0 0.0, 113
      %v651 = vpop.permute.xlu0 %650
      %652 = vrot.lane.b32.xlu0 %v408, 113
      %v653 = vpop.permute.xlu0 %652
      %654 = vrot.lane.b32.xlu0 %v409, 113
      %v655 = vpop.permute.xlu0 %654
      %656 = vrot.lane.b32.xlu0 %v410, 113
      %v657 = vpop.permute.xlu0 %656
      %658 = vrot.lane.b32.xlu0 %v411, 113
      %v659 = vpop.permute.xlu0 %658
      %660 = vrot.lane.b32.xlu0 %v412, 113
      %v661 = vpop.permute.xlu0 %660
      %662 = vrot.lane.b32.xlu0 %v413, 113
      %v663 = vpop.permute.xlu0 %662
      %vm664 = vcmask 924672
      %v665 = vsel %vm664, %v647, %v649
      %v666 = vsel %vm664, %v649, %v651
      %v667 = vsel %vm664, %v653, %v655
      %v668 = vsel %vm664, %v655, %v651
      %v669 = vsel %vm664, %v657, %v659
      %v670 = vsel %vm664, %v659, %v651
      %v671 = vsel %vm664, %v661, %v663
      %v672 = vsel %vm664, %v663, %v651
      %v681 = vsel %vm451, %v665, 0.0
      %v682 = vsel %vm452, %v666, 0.0
      %v683 = vsel %vm451, %v667, 0.0
      %v684 = vsel %vm452, %v668, 0.0
      %v685 = vsel %vm451, %v669, 0.0
      %v686 = vsel %vm452, %v670, 0.0
      %v687 = vsel %vm451, %v671, 0.0
      %v688 = vsel %vm452, %v672, 0.0
      %689 = vrot.lane.b32.xlu0 %v406, 111
      %v690 = vpop.permute.xlu0 %689
      %691 = vrot.lane.b32.xlu0 %v407, 111
      %v692 = vpop.permute.xlu0 %691
      %693 = vrot.lane.b32.xlu0 0.0, 111
      %v694 = vpop.permute.xlu0 %693
      %695 = vrot.lane.b32.xlu0 %v408, 111
      %v696 = vpop.permute.xlu0 %695
      %697 = vrot.lane.b32.xlu0 %v409, 111
      %v698 = vpop.permute.xlu0 %697
      %699 = vrot.lane.b32.xlu0 %v410, 111
      %v700 = vpop.permute.xlu0 %699
      %701 = vrot.lane.b32.xlu0 %v411, 111
      %v702 = vpop.permute.xlu0 %701
      %703 = vrot.lane.b32.xlu0 %v412, 111
      %v704 = vpop.permute.xlu0 %703
      %705 = vrot.lane.b32.xlu0 %v413, 111
      %v706 = vpop.permute.xlu0 %705
      %vm707 = vcmask 908288
      %v708 = vsel %vm707, %v690, %v692
      %v709 = vsel %vm707, %v692, %v694
      %v710 = vsel %vm707, %v696, %v698
      %v711 = vsel %vm707, %v698, %v694
      %v712 = vsel %vm707, %v700, %v702
      %v713 = vsel %vm707, %v702, %v694
      %v714 = vsel %vm707, %v704, %v706
      %v715 = vsel %vm707, %v706, %v694
      %v724 = vsel %vm515, %v708, 0.0
      %v725 = vsel %vm516, %v709, 0.0
      %v726 = vsel %vm515, %v710, 0.0
      %v727 = vsel %vm516, %v711, 0.0
      %v728 = vsel %vm515, %v712, 0.0
      %v729 = vsel %vm516, %v713, 0.0
      %v730 = vsel %vm515, %v714, 0.0
      %v731 = vsel %vm516, %v715, 0.0
      %732 = vrot.lane.b32.xlu0 0.0, 16
      %v733 = vpop.permute.xlu0 %732
      %734 = vrot.lane.b32.xlu0 %v406, 16
      %v735 = vpop.permute.xlu0 %734
      %736 = vrot.lane.b32.xlu0 %v407, 16
      %v737 = vpop.permute.xlu0 %736
      %738 = vrot.lane.b32.xlu0 %v408, 16
      %v739 = vpop.permute.xlu0 %738
      %740 = vrot.lane.b32.xlu0 %v409, 16
      %v741 = vpop.permute.xlu0 %740
      %742 = vrot.lane.b32.xlu0 %v410, 16
      %v743 = vpop.permute.xlu0 %742
      %744 = vrot.lane.b32.xlu0 %v411, 16
      %v745 = vpop.permute.xlu0 %744
      %746 = vrot.lane.b32.xlu0 %v412, 16
      %v747 = vpop.permute.xlu0 %746
      %748 = vrot.lane.b32.xlu0 %v413, 16
      %v749 = vpop.permute.xlu0 %748
      %vm750 = vcmask 130048
      %v751 = vsel %vm750, %v733, %v735
      %v752 = vsel %vm750, %v735, %v737
      %v753 = vsel %vm750, %v733, %v739
      %v754 = vsel %vm750, %v739, %v741
      %v755 = vsel %vm750, %v733, %v743
      %v756 = vsel %vm750, %v743, %v745
      %v757 = vsel %vm750, %v733, %v747
      %v758 = vsel %vm750, %v747, %v749
      %767 = vrot.lane.b32.xlu0 %v406, 112
      %v768 = vpop.permute.xlu0 %767
      %769 = vrot.lane.b32.xlu0 %v407, 112
      %v770 = vpop.permute.xlu0 %769
      %771 = vrot.lane.b32.xlu0 0.0, 112
      %v772 = vpop.permute.xlu0 %771
      %773 = vrot.lane.b32.xlu0 %v408, 112
      %v774 = vpop.permute.xlu0 %773
      %775 = vrot.lane.b32.xlu0 %v409, 112
      %v776 = vpop.permute.xlu0 %775
      %777 = vrot.lane.b32.xlu0 %v410, 112
      %v778 = vpop.permute.xlu0 %777
      %779 = vrot.lane.b32.xlu0 %v411, 112
      %v780 = vpop.permute.xlu0 %779
      %781 = vrot.lane.b32.xlu0 %v412, 112
      %v782 = vpop.permute.xlu0 %781
      %783 = vrot.lane.b32.xlu0 %v413, 112
      %v784 = vpop.permute.xlu0 %783
      %vm785 = vcmask 916480
      %v786 = vsel %vm785, %v768, %v770
      %v787 = vsel %vm785, %v770, %v772
      %v788 = vsel %vm785, %v774, %v776
      %v789 = vsel %vm785, %v776, %v772
      %v790 = vsel %vm785, %v778, %v780
      %v791 = vsel %vm785, %v780, %v772
      %v792 = vsel %vm785, %v782, %v784
      %v793 = vsel %vm785, %v784, %v772
      %v802 = vld [vmem:[%s2] sm:$0xff]
      %v803 = vld [vmem:[%s2 + $0x8] sm:$0xf]
      %v804 = vld [vmem:[%s2 + $0xc] sm:$0xff]
      %v805 = vld [vmem:[%s2 + $0x14] sm:$0xf]
      %v806 = vld [vmem:[%s2 + $0x18] sm:$0xff]
      %v807 = vld [vmem:[%s2 + $0x20] sm:$0xf]
      %v808 = vld [vmem:[%s2 + $0x24] sm:$0xff]
      %v809 = vld [vmem:[%s2 + $0x2c] sm:$0xf]
      %v810 = vpack.c.bf16 %v499, %v497
      %v811 = vpack.c.bf16 %v500, %v498
      %v812 = vpack.c.bf16 %v503, %v501
      %v813 = vpack.c.bf16 %v504, %v502
      %v814 = vpack.c.bf16 %v753, %v751
      %v815 = vpack.c.bf16 %v754, %v752
      %v816 = vpack.c.bf16 %v757, %v755
      %v817 = vpack.c.bf16 %v758, %v756
      %v818 = vpack.c.bf16 %v554, %v552
      %v819 = vpack.c.bf16 %v555, %v553
      %v820 = vpack.c.bf16 %v558, %v556
      %v821 = vpack.c.bf16 %v559, %v557
      %v822 = vpack.c.bf16 %v597, %v595
      %v823 = vpack.c.bf16 %v598, %v596
      %v824 = vpack.c.bf16 %v601, %v599
      %v825 = vpack.c.bf16 %v602, %v600
      %v826 = vpack.c.bf16 %v408, %v406
      %v827 = vpack.c.bf16 %v409, %v407
      %v828 = vpack.c.bf16 %v412, %v410
      %v829 = vpack.c.bf16 %v413, %v411
      %v830 = vpack.c.bf16 %v640, %v638
      %v831 = vpack.c.bf16 %v641, %v639
      %v832 = vpack.c.bf16 %v644, %v642
      %v833 = vpack.c.bf16 %v645, %v643
      %v834 = vpack.c.bf16 %v683, %v681
      %v835 = vpack.c.bf16 %v684, %v682
      %v836 = vpack.c.bf16 %v687, %v685
      %v837 = vpack.c.bf16 %v688, %v686
      %v838 = vpack.c.bf16 %v788, %v786
      %v839 = vpack.c.bf16 %v789, %v787
      %v840 = vpack.c.bf16 %v792, %v790
      %v841 = vpack.c.bf16 %v793, %v791
      %v842 = vpack.c.bf16 %v726, %v724
      %v843 = vpack.c.bf16 %v727, %v725
      %v844 = vpack.c.bf16 %v730, %v728
      %v845 = vpack.c.bf16 %v731, %v729
      %v854 = vunpack.c.l.b16 %v802
      %v855 = vunpack.c.h.b16 %v802
      %v856 = vunpack.c.l.b16 %v803
      %v857 = vunpack.c.l.b16 %v804
      %v858 = vunpack.c.h.b16 %v804
      %v859 = vunpack.c.l.b16 %v805
      %v860 = vunpack.c.l.b16 %v806
      %v861 = vunpack.c.h.b16 %v806
      %v862 = vunpack.c.l.b16 %v807
      %v863 = vunpack.c.l.b16 %v808
      %v864 = vunpack.c.h.b16 %v808
      %v865 = vunpack.c.l.b16 %v809
      %v866 = vpack.c.b16 %v857, %v854
      %v867 = vpack.c.b16 %v858, %v855
      %v868 = vpack.c.b16 %v859, %v856
      %v869 = vpack.c.b16 %v863, %v860
      %v870 = vpack.c.b16 %v864, %v861
      %v871 = vpack.c.b16 %v865, %v862
      %vm876 = vcmask 261120
      %v878 = vsel %vm876, %v868, 0
      %v881 = vsel %vm876, %v871, 0
      %883 = vmatpush.bf16.msra.mxu0 %v824
      %884 = vmatpush.bf16.msra.mxu0 %v822
      %885 = vmatpush.bf16.msra.mxu0 %v820
      %886 = vmatpush.bf16.msra.mxu0 %v818
      %887 = vmatpush.bf16.msra.mxu0 %v816
      %888 = vmatpush.bf16.msra.mxu0 %v814
      %889 = vmatpush.bf16.msra.mxu0 %v812
      %890 = vmatpush.bf16.msra.mxu0 %v810
      %891 = vmatmul.bf16.gmra.mxu0 %v866
      %v892 = vpop.f32.mrf.mxu0
      %v893 = vadd.f32 0.0, %v892
      %v894 = vpop.f32.mrf.mxu0
      %v895 = vadd.f32 0.0, %v894
      %896 = vmatmul.bf16.gmra.mxu0 %v869
      %v897 = vpop.f32.mrf.mxu0
      %v898 = vadd.f32 0.0, %v897
      %v899 = vpop.f32.mrf.mxu0
      %v900 = vadd.f32 0.0, %v899
      %901 = vdwg.mxu0
      %902 = vmatpush.bf16.msra.mxu0 %v840
      %903 = vmatpush.bf16.msra.mxu0 %v838
      %904 = vmatpush.bf16.msra.mxu0 %v836
      %905 = vmatpush.bf16.msra.mxu0 %v834
      %906 = vmatpush.bf16.msra.mxu0 %v832
      %907 = vmatpush.bf16.msra.mxu0 %v830
      %908 = vmatpush.bf16.msra.mxu0 %v828
      %909 = vmatpush.bf16.msra.mxu0 %v826
      %910 = vmatmul.bf16.gmra.mxu0 %v867
      %v911 = vpop.f32.mrf.mxu0
      %v912 = vadd.f32 %v893, %v911
      %v913 = vpop.f32.mrf.mxu0
      %v914 = vadd.f32 %v895, %v913
      %915 = vmatmul.bf16.gmra.mxu0 %v870
      %v916 = vpop.f32.mrf.mxu0
      %v917 = vadd.f32 %v898, %v916
      %v918 = vpop.f32.mrf.mxu0
      %v919 = vadd.f32 %v900, %v918
      %920 = vdwg.mxu0
      %921 = vmatpush.bf16.msra.mxu0 0
      %922 = vmatpush.bf16.msra.mxu0 0
      %923 = vmatpush.bf16.msra.mxu0 0
      %924 = vmatpush.bf16.msra.mxu0 0
      %925 = vmatpush.bf16.msra.mxu0 0
      %926 = vmatpush.bf16.msra.mxu0 0
      %927 = vmatpush.bf16.msra.mxu0 %v844
      %928 = vmatpush.bf16.msra.mxu0 %v842
      %929 = vmatmul.bf16.gmra.mxu0 %v878
      %v930 = vpop.f32.mrf.mxu0
      %v931 = vadd.f32 %v912, %v930
      %v932 = vpop.f32.mrf.mxu0
      %v933 = vadd.f32 %v914, %v932
      %934 = vmatmul.bf16.gmra.mxu0 %v881
      %v935 = vpop.f32.mrf.mxu0
      %v936 = vadd.f32 %v917, %v935
      %v937 = vpop.f32.mrf.mxu0
      %v938 = vadd.f32 %v919, %v937
      %939 = vdwg.mxu0
      %940 = vmatpush.bf16.msra.mxu0 %v825
      %941 = vmatpush.bf16.msra.mxu0 %v823
      %942 = vmatpush.bf16.msra.mxu0 %v821
      %943 = vmatpush.bf16.msra.mxu0 %v819
      %944 = vmatpush.bf16.msra.mxu0 %v817
      %945 = vmatpush.bf16.msra.mxu0 %v815
      %946 = vmatpush.bf16.msra.mxu0 %v813
      %947 = vmatpush.bf16.msra.mxu0 %v811
      %948 = vmatmul.bf16.gmra.mxu0 %v866
      %v949 = vpop.f32.mrf.mxu0
      %v950 = vadd.f32 0.0, %v949
      %v951 = vpop.f32.mrf.mxu0
      %v952 = vadd.f32 0.0, %v951
      %953 = vmatmul.bf16.gmra.mxu0 %v869
      %v954 = vpop.f32.mrf.mxu0
      %v955 = vadd.f32 0.0, %v954
      %v956 = vpop.f32.mrf.mxu0
      %v957 = vadd.f32 0.0, %v956
      %958 = vdwg.mxu0
      %959 = vmatpush.bf16.msra.mxu0 %v841
      %960 = vmatpush.bf16.msra.mxu0 %v839
      %961 = vmatpush.bf16.msra.mxu0 %v837
      %962 = vmatpush.bf16.msra.mxu0 %v835
      %963 = vmatpush.bf16.msra.mxu0 %v833
      %964 = vmatpush.bf16.msra.mxu0 %v831
      %965 = vmatpush.bf16.msra.mxu0 %v829
      %966 = vmatpush.bf16.msra.mxu0 %v827
      %967 = vmatmul.bf16.gmra.mxu0 %v867
      %v968 = vpop.f32.mrf.mxu0
      %v969 = vadd.f32 %v950, %v968
      %v970 = vpop.f32.mrf.mxu0
      %v971 = vadd.f32 %v952, %v970
      %972 = vmatmul.bf16.gmra.mxu0 %v870
      %v973 = vpop.f32.mrf.mxu0
      %v974 = vadd.f32 %v955, %v973
      %v975 = vpop.f32.mrf.mxu0
      %v976 = vadd.f32 %v957, %v975
      %977 = vdwg.mxu0
      %978 = vmatpush.bf16.msra.mxu0 0
      %979 = vmatpush.bf16.msra.mxu0 0
      %980 = vmatpush.bf16.msra.mxu0 0
      %981 = vmatpush.bf16.msra.mxu0 0
      %982 = vmatpush.bf16.msra.mxu0 0
      %983 = vmatpush.bf16.msra.mxu0 0
      %984 = vmatpush.bf16.msra.mxu0 %v845
      %985 = vmatpush.bf16.msra.mxu0 %v843
      %986 = vmatmul.bf16.gmra.mxu0 %v878
      %v987 = vpop.f32.mrf.mxu0
      %v988 = vadd.f32 %v969, %v987
      %v989 = vpop.f32.mrf.mxu0
      %v990 = vadd.f32 %v971, %v989
      %991 = vmatmul.bf16.gmra.mxu0 %v881
      %v992 = vpop.f32.mrf.mxu0
      %v993 = vadd.f32 %v974, %v992
      %v994 = vpop.f32.mrf.mxu0
      %v995 = vadd.f32 %v976, %v994
      %996 = vdwg.mxu0
      %vm997 = vcmp.ge.f32.partialorder %v931, 0.0
      %vm998 = vcmp.ge.f32.partialorder %v988, 0.0
      %vm999 = vcmp.ge.f32.partialorder %v933, 0.0
      %vm1000 = vcmp.ge.f32.partialorder %v990, 0.0
      %vm1001 = vcmp.ge.f32.partialorder %v936, 0.0
      %vm1002 = vcmp.ge.f32.partialorder %v993, 0.0
      %vm1003 = vcmp.ge.f32.partialorder %v938, 0.0
      %vm1004 = vcmp.ge.f32.partialorder %v995, 0.0
      %v1005 = vmul.f32 %v931, 0.2
      %v1006 = vmul.f32 %v988, 0.2
      %v1007 = vmul.f32 %v933, 0.2
      %v1008 = vmul.f32 %v990, 0.2
      %v1009 = vmul.f32 %v936, 0.2
      %v1010 = vmul.f32 %v993, 0.2
      %v1011 = vmul.f32 %v938, 0.2
      %v1012 = vmul.f32 %v995, 0.2
      %v1013 = vsel %vm997, %v931, %v1005
      %v1014 = vsel %vm998, %v988, %v1006
      %v1015 = vsel %vm999, %v933, %v1007
      %v1016 = vsel %vm1000, %v990, %v1008
      %v1017 = vsel %vm1001, %v936, %v1009
      %v1018 = vsel %vm1002, %v993, %v1010
      %v1019 = vsel %vm1003, %v938, %v1011
      %v1020 = vsel %vm1004, %v995, %v1012
      %v1021 = vld [vmem:[%s3] sm:$0xf]
      %v1022 = vld [vmem:[%s3 + $0x4] sm:$0xf]
      %v1023 = vld [vmem:[%s3 + $0x8] sm:$0xf]
      %v1024 = vld [vmem:[%s3 + $0xc] sm:$0xf]
      %v1025 = vld [vmem:[%s3 + $0x10] sm:$0xf]
      %v1026 = vld [vmem:[%s3 + $0x14] sm:$0xf]
      %v1027 = vld [vmem:[%s3 + $0x18] sm:$0xf]
      %v1028 = vld [vmem:[%s3 + $0x1c] sm:$0xf]
      %v1029 = vpack.c.bf16 %v1015, %v1013
      %v1030 = vpack.c.bf16 %v1016, %v1014
      %v1031 = vpack.c.bf16 %v1019, %v1017
      %v1032 = vpack.c.bf16 %v1020, %v1018
      %v1041 = vunpack.c.l.b16 %v1021
      %v1042 = vunpack.c.l.b16 %v1022
      %v1043 = vunpack.c.l.b16 %v1023
      %v1044 = vunpack.c.l.b16 %v1024
      %v1045 = vunpack.c.l.b16 %v1025
      %v1046 = vunpack.c.l.b16 %v1026
      %v1047 = vunpack.c.l.b16 %v1027
      %v1048 = vunpack.c.l.b16 %v1028
      %v1049 = vpack.c.b16 %v1042, %v1041
      %v1050 = vpack.c.b16 %v1044, %v1043
      %v1051 = vpack.c.b16 %v1046, %v1045
      %v1052 = vpack.c.b16 %v1048, %v1047
      %v1054 = vsel %vm876, %v1049, 0
      %v1057 = vsel %vm876, %v1050, 0
      %v1060 = vsel %vm876, %v1051, 0
      %v1063 = vsel %vm876, %v1052, 0
      %1065 = vmatpush.bf16.msra.mxu0 0
      %1066 = vmatpush.bf16.msra.mxu0 0
      %1067 = vmatpush.bf16.msra.mxu0 0
      %1068 = vmatpush.bf16.msra.mxu0 0
      %1069 = vmatpush.bf16.msra.mxu0 0
      %1070 = vmatpush.bf16.msra.mxu0 0
      %1071 = vmatpush.bf16.msra.mxu0 %v1031
      %1072 = vmatpush.bf16.msra.mxu0 %v1029
      %1073 = vmatmul.bf16.gmra.mxu0 %v1054
      %v1074 = vpop.f32.mrf.mxu0
      %v1075 = vadd.f32 0.0, %v1074
      %v1076 = vpop.f32.mrf.mxu0
      %v1077 = vadd.f32 0.0, %v1076
      %1078 = vmatmul.bf16.gmra.mxu0 %v1057
      %v1079 = vpop.f32.mrf.mxu0
      %v1080 = vadd.f32 0.0, %v1079
      %v1081 = vpop.f32.mrf.mxu0
      %v1082 = vadd.f32 0.0, %v1081
      %1083 = vmatmul.bf16.gmra.mxu0 %v1060
      %v1084 = vpop.f32.mrf.mxu0
      %v1085 = vadd.f32 0.0, %v1084
      %v1086 = vpop.f32.mrf.mxu0
      %v1087 = vadd.f32 0.0, %v1086
      %1088 = vmatmul.bf16.gmra.mxu0 %v1063
      %v1089 = vpop.f32.mrf.mxu0
      %v1090 = vadd.f32 0.0, %v1089
      %v1091 = vpop.f32.mrf.mxu0
      %v1092 = vadd.f32 0.0, %v1091
      %1093 = vdwg.mxu0
      %1094 = vmatpush.bf16.msra.mxu0 0
      %1095 = vmatpush.bf16.msra.mxu0 0
      %1096 = vmatpush.bf16.msra.mxu0 0
      %1097 = vmatpush.bf16.msra.mxu0 0
      %1098 = vmatpush.bf16.msra.mxu0 0
      %1099 = vmatpush.bf16.msra.mxu0 0
      %1100 = vmatpush.bf16.msra.mxu0 %v1032
      %1101 = vmatpush.bf16.msra.mxu0 %v1030
      %1102 = vmatmul.bf16.gmra.mxu0 %v1054
      %v1103 = vpop.f32.mrf.mxu0
      %v1104 = vadd.f32 0.0, %v1103
      %v1105 = vpop.f32.mrf.mxu0
      %v1106 = vadd.f32 0.0, %v1105
      %1107 = vmatmul.bf16.gmra.mxu0 %v1057
      %v1108 = vpop.f32.mrf.mxu0
      %v1109 = vadd.f32 0.0, %v1108
      %v1110 = vpop.f32.mrf.mxu0
      %v1111 = vadd.f32 0.0, %v1110
      %1112 = vmatmul.bf16.gmra.mxu0 %v1060
      %v1113 = vpop.f32.mrf.mxu0
      %v1114 = vadd.f32 0.0, %v1113
      %v1115 = vpop.f32.mrf.mxu0
      %v1116 = vadd.f32 0.0, %v1115
      %1117 = vmatmul.bf16.gmra.mxu0 %v1063
      %v1118 = vpop.f32.mrf.mxu0
      %v1119 = vadd.f32 0.0, %v1118
      %v1120 = vpop.f32.mrf.mxu0
      %v1121 = vadd.f32 0.0, %v1120
      %1122 = vdwg.mxu0
      %v1123 = vadd.f32 %v1075, %v1104
      %1124 = vadd.xlane.f32.xlu0 %v1123
      %v1125 = vpop.xlane.xlu0 %1124
      %v1126 = vadd.f32 %v1077, %v1106
      %1127 = vadd.xlane.f32.xlu0 %v1126
      %v1128 = vpop.xlane.xlu0 %1127
      %v1129 = vadd.f32 %v1080, %v1109
      %1130 = vadd.xlane.f32.xlu0 %v1129
      %v1131 = vpop.xlane.xlu0 %1130
      %v1132 = vadd.f32 %v1082, %v1111
      %1133 = vadd.xlane.f32.xlu0 %v1132
      %v1134 = vpop.xlane.xlu0 %1133
      %v1135 = vadd.f32 %v1085, %v1114
      %1136 = vadd.xlane.f32.xlu0 %v1135
      %v1137 = vpop.xlane.xlu0 %1136
      %v1138 = vadd.f32 %v1087, %v1116
      %1139 = vadd.xlane.f32.xlu0 %v1138
      %v1140 = vpop.xlane.xlu0 %1139
      %v1141 = vadd.f32 %v1090, %v1119
      %1142 = vadd.xlane.f32.xlu0 %v1141
      %v1143 = vpop.xlane.xlu0 %1142
      %v1144 = vadd.f32 %v1092, %v1121
      %1145 = vadd.xlane.f32.xlu0 %v1144
      %v1146 = vpop.xlane.xlu0 %1145
      %v1147 = vrcp.pop 256.0
      %v1148 = vmul.f32 256.0, %v1147
      %v1149 = vsub.f32 1.0, %v1148
      %v1150 = vmul.f32 %v1147, %v1149
      %v1151 = vadd.f32 %v1147, %v1150
      %vm1152 = vweird.f32 %v1147
      %v1153 = vsel %vm1152, %v1147, %v1151
      %v1154 = vmul.f32 %v1125, %v1153
      %v1155 = vmul.f32 %v1128, %v1153
      %v1156 = vmul.f32 %v1131, %v1153
      %v1157 = vmul.f32 %v1134, %v1153
      %v1158 = vmul.f32 %v1137, %v1153
      %v1159 = vmul.f32 %v1140, %v1153
      %v1160 = vmul.f32 %v1143, %v1153
      %v1161 = vmul.f32 %v1146, %v1153
      %v1162 = vld [vmem:[%s4] sm:$0xff]
      %v1163 = vld [vmem:[%s4 + $0x8] sm:$0xff]
      %v1164 = vld [vmem:[%s4 + $0x10] sm:$0xff]
      %v1165 = vld [vmem:[%s4 + $0x18] sm:$0xff]
      %v1166 = vld [vmem:[%s4 + $0x20] sm:$0xff]
      %v1167 = vld [vmem:[%s4 + $0x28] sm:$0xff]
      %v1168 = vld [vmem:[%s4 + $0x30] sm:$0xff]
      %v1169 = vld [vmem:[%s4 + $0x38] sm:$0xff]
      %v1170 = vmul.f32 %v1162, %v1154
      %v1171 = vmul.f32 %v1163, %v1155
      %v1172 = vmul.f32 %v1164, %v1156
      %v1173 = vmul.f32 %v1165, %v1157
      %v1174 = vmul.f32 %v1166, %v1158
      %v1175 = vmul.f32 %v1167, %v1159
      %v1176 = vmul.f32 %v1168, %v1160
      %v1177 = vmul.f32 %v1169, %v1161
      %vm1178 = vcmask 31744
      %v1179 = vsel %vm1178, %v1170, 0.0
      %v1180 = vsel %vm1178, %v1171, 0.0
      %v1181 = vadd.f32 %v1179, %v1180
      %v1182 = vsel %vm1178, %v1172, 0.0
      %v1183 = vadd.f32 %v1181, %v1182
      %v1184 = vsel %vm1178, %v1173, 0.0
      %v1185 = vadd.f32 %v1183, %v1184
      %v1186 = vsel %vm1178, %v1174, 0.0
      %v1187 = vadd.f32 %v1185, %v1186
      %v1188 = vsel %vm1178, %v1175, 0.0
      %v1189 = vadd.f32 %v1187, %v1188
      %v1190 = vsel %vm1178, %v1176, 0.0
      %v1191 = vadd.f32 %v1189, %v1190
      %v1192 = vsel %vm1178, %v1177, 0.0
      %v1193 = vadd.f32 %v1191, %v1192
      %v1194 = vrot.slane %v1193, 4
      %v1195 = vadd.f32 %v1193, %v1194
      %v1196 = vrot.slane %v1195, 2
      %v1197 = vadd.f32 %v1195, %v1196
      %v1198 = vrot.slane %v1197, 1
      %v1199 = vadd.f32 %v1197, %v1198
      %v1200 = vld [vmem:[%s5] sm:$0x1]
      %v1201 = vadd.f32 %v1199, %v1200
      %v1202 = vmax.f32 %v1201, 0.0
      %v1203 = vld [vmem:[%s6] sm:$0xff]
      %v1204 = vld [vmem:[%s6 + $0x8] sm:$0xff]
      %v1205 = vld [vmem:[%s6 + $0x10] sm:$0xff]
      %v1206 = vld [vmem:[%s6 + $0x18] sm:$0xff]
      %v1207 = vld [vmem:[%s6 + $0x20] sm:$0xff]
      %v1208 = vld [vmem:[%s6 + $0x28] sm:$0xff]
      %v1209 = vld [vmem:[%s6 + $0x30] sm:$0xff]
      %v1210 = vld [vmem:[%s6 + $0x38] sm:$0xff]
      %v1211 = vperm.slane %v1202, 0
      %v1212 = vmul.f32 %v1203, %v1211
      %v1213 = vmul.f32 %v1204, %v1211
      %v1214 = vmul.f32 %v1205, %v1211
      %v1215 = vmul.f32 %v1206, %v1211
      %v1216 = vmul.f32 %v1207, %v1211
      %v1217 = vmul.f32 %v1208, %v1211
      %v1218 = vmul.f32 %v1209, %v1211
      %v1219 = vmul.f32 %v1210, %v1211
      %v1220 = vsel %vm1178, %v1212, 0.0
      %1221 = vadd.xlane.f32.xlu0 %v1220
      %v1222 = vpop.xlane.xlu0 %1221
      %v1223 = vsel %vm1178, %v1213, 0.0
      %1224 = vadd.xlane.f32.xlu0 %v1223
      %v1225 = vpop.xlane.xlu0 %1224
      %v1226 = vsel %vm1178, %v1214, 0.0
      %1227 = vadd.xlane.f32.xlu0 %v1226
      %v1228 = vpop.xlane.xlu0 %1227
      %v1229 = vsel %vm1178, %v1215, 0.0
      %1230 = vadd.xlane.f32.xlu0 %v1229
      %v1231 = vpop.xlane.xlu0 %1230
      %v1232 = vsel %vm1178, %v1216, 0.0
      %1233 = vadd.xlane.f32.xlu0 %v1232
      %v1234 = vpop.xlane.xlu0 %1233
      %v1235 = vsel %vm1178, %v1217, 0.0
      %1236 = vadd.xlane.f32.xlu0 %v1235
      %v1237 = vpop.xlane.xlu0 %1236
      %v1238 = vsel %vm1178, %v1218, 0.0
      %1239 = vadd.xlane.f32.xlu0 %v1238
      %v1240 = vpop.xlane.xlu0 %1239
      %v1241 = vsel %vm1178, %v1219, 0.0
      %1242 = vadd.xlane.f32.xlu0 %v1241
      %v1243 = vpop.xlane.xlu0 %1242
      %v1244 = vld [vmem:[%s7] sm:$0xff]
      %v1245 = vld [vmem:[%s7 + $0x8] sm:$0xff]
      %v1246 = vld [vmem:[%s7 + $0x10] sm:$0xff]
      %v1247 = vld [vmem:[%s7 + $0x18] sm:$0xff]
      %v1248 = vld [vmem:[%s7 + $0x20] sm:$0xff]
      %v1249 = vld [vmem:[%s7 + $0x28] sm:$0xff]
      %v1250 = vld [vmem:[%s7 + $0x30] sm:$0xff]
      %v1251 = vld [vmem:[%s7 + $0x38] sm:$0xff]
      %v1252 = vadd.f32 %v1222, %v1244
      %v1253 = vadd.f32 %v1225, %v1245
      %v1254 = vadd.f32 %v1228, %v1246
      %v1255 = vadd.f32 %v1231, %v1247
      %v1256 = vadd.f32 %v1234, %v1248
      %v1257 = vadd.f32 %v1237, %v1249
      %v1258 = vadd.f32 %v1240, %v1250
      %v1259 = vadd.f32 %v1243, %v1251
      %v1260 = vxor.u32 %v1252, 2147483648
      %v1261 = vxor.u32 %v1253, 2147483648
      %v1262 = vxor.u32 %v1254, 2147483648
      %v1263 = vxor.u32 %v1255, 2147483648
      %v1264 = vxor.u32 %v1256, 2147483648
      %v1265 = vxor.u32 %v1257, 2147483648
      %v1266 = vxor.u32 %v1258, 2147483648
      %v1267 = vxor.u32 %v1259, 2147483648
      %v1268 = vmul.f32 %v1260, 1.442695
      %v1269 = vpow.pop %v1268
      %v1270 = vmul.f32 %v1261, 1.442695
      %v1271 = vpow.pop %v1270
      %v1272 = vmul.f32 %v1262, 1.442695
      %v1273 = vpow.pop %v1272
      %v1274 = vmul.f32 %v1263, 1.442695
      %v1275 = vpow.pop %v1274
      %v1276 = vmul.f32 %v1264, 1.442695
      %v1277 = vpow.pop %v1276
      %v1278 = vmul.f32 %v1265, 1.442695
      %v1279 = vpow.pop %v1278
      %v1280 = vmul.f32 %v1266, 1.442695
      %v1281 = vpow.pop %v1280
      %v1282 = vmul.f32 %v1267, 1.442695
      %v1283 = vpow.pop %v1282
      %v1284 = vadd.f32 %v1269, 1.0
      %v1285 = vadd.f32 %v1271, 1.0
      %v1286 = vadd.f32 %v1273, 1.0
      %v1287 = vadd.f32 %v1275, 1.0
      %v1288 = vadd.f32 %v1277, 1.0
      %v1289 = vadd.f32 %v1279, 1.0
      %v1290 = vadd.f32 %v1281, 1.0
      %v1291 = vadd.f32 %v1283, 1.0
      %v1292 = vrcp.pop %v1284
      %v1293 = vmul.f32 %v1284, %v1292
      %v1294 = vsub.f32 1.0, %v1293
      %v1295 = vmul.f32 %v1292, %v1294
      %v1296 = vadd.f32 %v1292, %v1295
      %vm1297 = vweird.f32 %v1284
      %vm1298 = vweird.f32 %v1292
      %vm1299 = vmor %vm1297, %vm1298
      %v1300 = vsel %vm1299, %v1292, %v1296
      %v1301 = vand.u32 2147483647, %v1284
      %vm1302 = vcmp.eq.f32.partialorder %v1301, 8.507059e+37
      %v1303 = vand.u32 %v1284, 2147483648
      %v1304 = vor.u32 1.1754944e-38, %v1303
      %v1305 = vsel %vm1302, %v1304, %v1300
      %v1306 = vmul.f32 1.0, %v1305
      %v1307 = vrcp.pop %v1285
      %v1308 = vmul.f32 %v1285, %v1307
      %v1309 = vsub.f32 1.0, %v1308
      %v1310 = vmul.f32 %v1307, %v1309
      %v1311 = vadd.f32 %v1307, %v1310
      %vm1312 = vweird.f32 %v1285
      %vm1313 = vweird.f32 %v1307
      %vm1314 = vmor %vm1312, %vm1313
      %v1315 = vsel %vm1314, %v1307, %v1311
      %v1316 = vand.u32 2147483647, %v1285
      %vm1317 = vcmp.eq.f32.partialorder %v1316, 8.507059e+37
      %v1318 = vand.u32 %v1285, 2147483648
      %v1319 = vor.u32 1.1754944e-38, %v1318
      %v1320 = vsel %vm1317, %v1319, %v1315
      %v1321 = vmul.f32 1.0, %v1320
      %v1322 = vrcp.pop %v1286
      %v1323 = vmul.f32 %v1286, %v1322
      %v1324 = vsub.f32 1.0, %v1323
      %v1325 = vmul.f32 %v1322, %v1324
      %v1326 = vadd.f32 %v1322, %v1325
      %vm1327 = vweird.f32 %v1286
      %vm1328 = vweird.f32 %v1322
      %vm1329 = vmor %vm1327, %vm1328
      %v1330 = vsel %vm1329, %v1322, %v1326
      %v1331 = vand.u32 2147483647, %v1286
      %vm1332 = vcmp.eq.f32.partialorder %v1331, 8.507059e+37
      %v1333 = vand.u32 %v1286, 2147483648
      %v1334 = vor.u32 1.1754944e-38, %v1333
      %v1335 = vsel %vm1332, %v1334, %v1330
      %v1336 = vmul.f32 1.0, %v1335
      %v1337 = vrcp.pop %v1287
      %v1338 = vmul.f32 %v1287, %v1337
      %v1339 = vsub.f32 1.0, %v1338
      %v1340 = vmul.f32 %v1337, %v1339
      %v1341 = vadd.f32 %v1337, %v1340
      %vm1342 = vweird.f32 %v1287
      %vm1343 = vweird.f32 %v1337
      %vm1344 = vmor %vm1342, %vm1343
      %v1345 = vsel %vm1344, %v1337, %v1341
      %v1346 = vand.u32 2147483647, %v1287
      %vm1347 = vcmp.eq.f32.partialorder %v1346, 8.507059e+37
      %v1348 = vand.u32 %v1287, 2147483648
      %v1349 = vor.u32 1.1754944e-38, %v1348
      %v1350 = vsel %vm1347, %v1349, %v1345
      %v1351 = vmul.f32 1.0, %v1350
      %v1352 = vrcp.pop %v1288
      %v1353 = vmul.f32 %v1288, %v1352
      %v1354 = vsub.f32 1.0, %v1353
      %v1355 = vmul.f32 %v1352, %v1354
      %v1356 = vadd.f32 %v1352, %v1355
      %vm1357 = vweird.f32 %v1288
      %vm1358 = vweird.f32 %v1352
      %vm1359 = vmor %vm1357, %vm1358
      %v1360 = vsel %vm1359, %v1352, %v1356
      %v1361 = vand.u32 2147483647, %v1288
      %vm1362 = vcmp.eq.f32.partialorder %v1361, 8.507059e+37
      %v1363 = vand.u32 %v1288, 2147483648
      %v1364 = vor.u32 1.1754944e-38, %v1363
      %v1365 = vsel %vm1362, %v1364, %v1360
      %v1366 = vmul.f32 1.0, %v1365
      %v1367 = vrcp.pop %v1289
      %v1368 = vmul.f32 %v1289, %v1367
      %v1369 = vsub.f32 1.0, %v1368
      %v1370 = vmul.f32 %v1367, %v1369
      %v1371 = vadd.f32 %v1367, %v1370
      %vm1372 = vweird.f32 %v1289
      %vm1373 = vweird.f32 %v1367
      %vm1374 = vmor %vm1372, %vm1373
      %v1375 = vsel %vm1374, %v1367, %v1371
      %v1376 = vand.u32 2147483647, %v1289
      %vm1377 = vcmp.eq.f32.partialorder %v1376, 8.507059e+37
      %v1378 = vand.u32 %v1289, 2147483648
      %v1379 = vor.u32 1.1754944e-38, %v1378
      %v1380 = vsel %vm1377, %v1379, %v1375
      %v1381 = vmul.f32 1.0, %v1380
      %v1382 = vrcp.pop %v1290
      %v1383 = vmul.f32 %v1290, %v1382
      %v1384 = vsub.f32 1.0, %v1383
      %v1385 = vmul.f32 %v1382, %v1384
      %v1386 = vadd.f32 %v1382, %v1385
      %vm1387 = vweird.f32 %v1290
      %vm1388 = vweird.f32 %v1382
      %vm1389 = vmor %vm1387, %vm1388
      %v1390 = vsel %vm1389, %v1382, %v1386
      %v1391 = vand.u32 2147483647, %v1290
      %vm1392 = vcmp.eq.f32.partialorder %v1391, 8.507059e+37
      %v1393 = vand.u32 %v1290, 2147483648
      %v1394 = vor.u32 1.1754944e-38, %v1393
      %v1395 = vsel %vm1392, %v1394, %v1390
      %v1396 = vmul.f32 1.0, %v1395
      %v1397 = vrcp.pop %v1291
      %v1398 = vmul.f32 %v1291, %v1397
      %v1399 = vsub.f32 1.0, %v1398
      %v1400 = vmul.f32 %v1397, %v1399
      %v1401 = vadd.f32 %v1397, %v1400
      %vm1402 = vweird.f32 %v1291
      %vm1403 = vweird.f32 %v1397
      %vm1404 = vmor %vm1402, %vm1403
      %v1405 = vsel %vm1404, %v1397, %v1401
      %v1406 = vand.u32 2147483647, %v1291
      %vm1407 = vcmp.eq.f32.partialorder %v1406, 8.507059e+37
      %v1408 = vand.u32 %v1291, 2147483648
      %v1409 = vor.u32 1.1754944e-38, %v1408
      %v1410 = vsel %vm1407, %v1409, %v1405
      %v1411 = vmul.f32 1.0, %v1410
      %1413 = vset.pattern.permute.xlu0 0
      %1414 = vperm.xlu0 %1413, %v1306
      %v1415 = vpop.permute.xlu0 %1414
      %1418 = vset.pattern.permute.xlu0 0
      %1419 = vperm.xlu0 %1418, %v1321
      %v1420 = vpop.permute.xlu0 %1419
      %1423 = vset.pattern.permute.xlu0 0
      %1424 = vperm.xlu0 %1423, %v1336
      %v1425 = vpop.permute.xlu0 %1424
      %1428 = vset.pattern.permute.xlu0 0
      %1429 = vperm.xlu0 %1428, %v1351
      %v1430 = vpop.permute.xlu0 %1429
      %1433 = vset.pattern.permute.xlu0 0
      %1434 = vperm.xlu0 %1433, %v1366
      %v1435 = vpop.permute.xlu0 %1434
      %1438 = vset.pattern.permute.xlu0 0
      %1439 = vperm.xlu0 %1438, %v1381
      %v1440 = vpop.permute.xlu0 %1439
      %1443 = vset.pattern.permute.xlu0 0
      %1444 = vperm.xlu0 %1443, %v1396
      %v1445 = vpop.permute.xlu0 %1444
      %1448 = vset.pattern.permute.xlu0 0
      %1449 = vperm.xlu0 %1448, %v1411
      %v1450 = vpop.permute.xlu0 %1449
      %v1452 = vmul.f32 %v1075, %v1415
      %v1453 = vmul.f32 %v1104, %v1415
      %v1454 = vmul.f32 %v1077, %v1420
      %v1455 = vmul.f32 %v1106, %v1420
      %v1456 = vmul.f32 %v1080, %v1425
      %v1457 = vmul.f32 %v1109, %v1425
      %v1458 = vmul.f32 %v1082, %v1430
      %v1459 = vmul.f32 %v1111, %v1430
      %v1460 = vmul.f32 %v1085, %v1435
      %v1461 = vmul.f32 %v1114, %v1435
      %v1462 = vmul.f32 %v1087, %v1440
      %v1463 = vmul.f32 %v1116, %v1440
      %v1464 = vmul.f32 %v1090, %v1445
      %v1465 = vmul.f32 %v1119, %v1445
      %v1466 = vmul.f32 %v1092, %v1450
      %v1467 = vmul.f32 %v1121, %v1450
      %v1468 = vadd.f32 %v307, %v1452
      %v1469 = vadd.f32 %v308, %v1453
      %v1470 = vadd.f32 %v309, %v1454
      %v1471 = vadd.f32 %v310, %v1455
      %v1472 = vadd.f32 %v311, %v1456
      %v1473 = vadd.f32 %v312, %v1457
      %v1474 = vadd.f32 %v313, %v1458
      %v1475 = vadd.f32 %v314, %v1459
      %v1476 = vadd.f32 %v315, %v1460
      %v1477 = vadd.f32 %v316, %v1461
      %v1478 = vadd.f32 %v317, %v1462
      %v1479 = vadd.f32 %v318, %v1463
      %v1480 = vadd.f32 %v319, %v1464
      %v1481 = vadd.f32 %v320, %v1465
      %v1482 = vadd.f32 %v321, %v1466
      %v1483 = vadd.f32 %v322, %v1467
      %1484 = vst [vmem:[%s305] sm:$0xff] %v1468
      %1485 = vst [vmem:[%s305 + $0x8] sm:$0xff] %v1469
      %1486 = vst [vmem:[%s305 + $0x10] sm:$0xff] %v1470
      %1487 = vst [vmem:[%s305 + $0x18] sm:$0xff] %v1471
      %1488 = vst [vmem:[%s305 + $0x20] sm:$0xff] %v1472
      %1489 = vst [vmem:[%s305 + $0x28] sm:$0xff] %v1473
      %1490 = vst [vmem:[%s305 + $0x30] sm:$0xff] %v1474
      %1491 = vst [vmem:[%s305 + $0x38] sm:$0xff] %v1475
      %1492 = vst [vmem:[%s305 + $0x40] sm:$0xff] %v1476
      %1493 = vst [vmem:[%s305 + $0x48] sm:$0xff] %v1477
      %1494 = vst [vmem:[%s305 + $0x50] sm:$0xff] %v1478
      %1495 = vst [vmem:[%s305 + $0x58] sm:$0xff] %v1479
      %1496 = vst [vmem:[%s305 + $0x60] sm:$0xff] %v1480
      %1497 = vst [vmem:[%s305 + $0x68] sm:$0xff] %v1481
      %1498 = vst [vmem:[%s305 + $0x70] sm:$0xff] %v1482
      %1499 = vst [vmem:[%s305 + $0x78] sm:$0xff] %v1483
      %p1500 = scmp.lt.s32.totalorder %s19, 1
      %s1501 = scalar_select %p1500, %s19, 1
      %s1502 = smul.addr %s1501, 16
      %s1503 = smul.addr %s1502, 8
      %s1504 = scalar_lea.vmem %s8, %s1503
      // Predicated region
      $region53: #{_lambda_.1} parent=51 // pred_check
        %p1505 = pneg %p210
      $region54: #{_lambda_.1} parent=51 // pred_check_branch
        %1507 = sbr.rel (%p1505) target = $region56
      $region55: #{_lambda_.1} parent=51 // pred_region
        _
      $region56: #{_lambda_.1} parent=51 // pred_fallthru
        _
    $region52: #{_lambda_.1} parent=5 // pred_fallthru
      _
    %p1508 = scmp.le.s32.totalorder 2, %s14
    // Predicated region
    $region57: #{_lambda_.1} parent=5 // pred_check
      %p1509 = pneg %p1508
    $region58: #{_lambda_.1} parent=5 // pred_check_branch
      %1511 = sbr.rel (%p1509) target = $region60
    $region59: #{_lambda_.1} parent=5 // pred_region
      %s1512 = ssub.s32 %s14, 2
      // Predicated region
      $region61: #{_lambda_.1} parent=59 // pred_check
        %p1513 = pneg %p216
      $region62: #{_lambda_.1} parent=59 // pred_check_branch
        %1515 = sbr.rel (%p1513) target = $region64
      $region63: #{_lambda_.1} parent=59 // pred_region
        %p1516 = scmp.lt.s32.totalorder %s20, 1
        %s1517 = scalar_select %p1516, %s20, 1
        %s1518 = smul.addr %s1517, 16
        %s1519 = smul.addr %s1518, 8
        %s1520 = scalar_lea.vmem %s8, %s1519
      $region64: #{_lambda_.1} parent=59 // pred_fallthru
        _
    $region60: #{_lambda_.1} parent=5 // pred_fallthru
      _
  $region6: #{_lambda_.1} parent=0 // loop_footer
    %s18 = sadd.s32 1, %s14
  $region7: #{_lambda_.1} parent=0 // loop_footer_branch
    %13 = sbr.rel target = $region3
  $region8: #{_lambda_.1} parent=0 // loop_exit
    _

</llo_original>
